<compile_context>
chip_gen: v7x
topology: tpu7x:2x2x1
jax: 0.10.0
libtpu: 0.0.40
codegen_flags: <defaults>
</compile_context>

<pallas_src>
import numpy as np
import jax
import jax.numpy as jnp
from jax.experimental import pallas as pl
from jax.experimental.pallas import tpu as pltpu


def _make_kernel(out_dim: int, include_input: bool, reps: int):
    base = 3 if include_input else 0

    def kernel(coef_ref, phase_ref, x_ref, o_ref):
        # x_ref     : (3, bn)        raw xyz, feature-major, N on lanes
        # coef_ref  : (out_dim, 1)   per-row multiplier (aniso_j or freq_f*aniso_j)
        # phase_ref : (out_dim, 1)   0 for passthrough/sin rows, pi/2 for cos rows
        # o_ref     : (out_dim, bn)  rows in PyTorch concat order
        x = x_ref[...]                                       # (3, bn)
        xrep = jnp.concatenate([x] * reps, axis=0)           # (out_dim, bn)
        t = xrep * coef_ref[...] + phase_ref[...]            # lane-broadcast of (out_dim,1)
        s = jnp.sin(t)                                       # EUP; covers sin AND cos rows
        if include_input:
            # Rows < 3 are the linear passthrough (phase there is 0, so t is exact).
            row = jax.lax.broadcasted_iota(jnp.int32, t.shape, 0)
            out = jnp.where(row < base, t, s)
        else:
            out = s
        # One full, aligned, lane-dense store of the whole block.
        o_ref[...] = out.astype(o_ref.dtype)

    return kernel


def anisotropic_encode(
    x: jax.Array,
    num_freqs: int = 10,
    anisotropy_factors=None,
    include_input: bool = True,
    block_n: int = 8192,
    out_dtype=jnp.float32,
    feature_major_output: bool = False,
):
    """Pallas TPU implementation of AnisotropicEncoder.forward.

    Args:
      x: [N, 3] coordinates.
    Returns:
      [N, (2*num_freqs + 1)*3] (or [N, 2*num_freqs*3] if include_input=False),
      matching the PyTorch concat order.  If feature_major_output=True the
      transposed [out_dim, N] layout is returned (skips the trailing XLA
      transpose; recommended when the consumer can contract over that axis).
    """
    if anisotropy_factors is None:
        anisotropy_factors = [1.0, 1.0, 0.5]
    aniso = np.asarray(anisotropy_factors, dtype=np.float32)
    assert aniso.shape == (3,), "expects 3 anisotropy factors"
    freq_bands = (2.0 ** np.linspace(0.0, num_freqs - 1, num_freqs)).astype(np.float32)

    n, d = x.shape
    assert d == 3, "AnisotropicEncoder expects [N, 3] coordinates"
    out_dim = (2 * num_freqs + 1) * 3 if include_input else 2 * num_freqs * 3
    reps = out_dim // 3

    # --- per-row coefficient / phase columns in PyTorch concat order ---------
    # trig rows per frequency f: 3 sin rows (coef f*aniso, phase 0) then
    # 3 cos rows (coef f*aniso, phase pi/2).
    fa = freq_bands[:, None] * aniso[None, :]                       # (F, 3)
    trig_coef = np.repeat(fa, 2, axis=0).reshape(-1).astype(np.float32)   # (6F,)
    trig_phase = np.tile(
        np.concatenate([np.zeros(3, np.float32),
                        np.full(3, np.pi / 2.0, np.float32)]), num_freqs)  # (6F,)
    if include_input:
        coef = np.concatenate([aniso, trig_coef])
        phase = np.concatenate([np.zeros(3, np.float32), trig_phase])
    else:
        coef, phase = trig_coef, trig_phase
    coef_col = jnp.asarray(coef.reshape(out_dim, 1))
    phase_col = jnp.asarray(phase.reshape(out_dim, 1))

    # --- lane blocking: block_n multiple of 128, clamped for small N ---------
    block_n = max(128, (int(block_n) // 128) * 128)
    n_ceil128 = ((n + 127) // 128) * 128
    block_n = min(block_n, n_ceil128)
    n_pad = ((n + block_n - 1) // block_n) * block_n

    xt = jnp.asarray(x, jnp.float32).T                              # (3, N) feature-major
    if n_pad != n:
        xt = jnp.pad(xt, ((0, 0), (0, n_pad - n)))

    # Only raise the scoped-VMEM limit if a user-chosen large block needs it
    # (keeps the v7x 64 MiB budget safe at the default block_n=8192).
    bytes_per_block = (2 * (out_dim + 3) + 4 * out_dim) * block_n * 4
    vmem_limit = None
    if bytes_per_block > 24 * 1024 * 1024:
        vmem_limit = min(int(1.25 * bytes_per_block) + (1 << 20), 100 * 1024 * 1024)

    kernel = _make_kernel(out_dim, include_input, reps)

    out_t = pl.pallas_call(
        kernel,
        out_shape=jax.ShapeDtypeStruct((out_dim, n_pad), out_dtype),
        grid_spec=pltpu.PrefetchScalarGridSpec(
            num_scalar_prefetch=0,
            grid=(n_pad // block_n,),
            in_specs=[
                pl.BlockSpec((out_dim, 1), lambda i: (0, 0)),        # coef (resident)
                pl.BlockSpec((out_dim, 1), lambda i: (0, 0)),        # phase (resident)
                pl.BlockSpec((3, block_n), lambda i: (0, i)),        # x tile, N on lanes
            ],
            out_specs=pl.BlockSpec((out_dim, block_n), lambda i: (0, i)),
        ),
        compiler_params=pltpu.CompilerParams(
            dimension_semantics=("parallel",),
            vmem_limit_bytes=vmem_limit,
        ),
    )(coef_col, phase_col, xt)

    if feature_major_output:
        return out_t[:, :n]
    return out_t[:, :n].T


def _reference(x, num_freqs=10, anisotropy_factors=None, include_input=True):
    """Plain-JAX reference mirroring the PyTorch forward exactly."""
    if anisotropy_factors is None:
        anisotropy_factors = [1.0, 1.0, 0.5]
    aniso = jnp.asarray(anisotropy_factors, dtype=jnp.float32)
    freq_bands = 2.0 ** jnp.linspace(0.0, num_freqs - 1, num_freqs)
    xa = x * aniso
    enc = [xa] if include_input else []
    for f in freq_bands:
        enc.append(jnp.sin(xa * f))
        enc.append(jnp.cos(xa * f))
    return jnp.concatenate(enc, axis=-1)


if __name__ == "__main__":
    key = jax.random.PRNGKey(0)

    # Small batch of normalized 3-D points; block_n=256 so padding (1000->1024)
    # and a multi-step grid (4 tiles) are both exercised.
    N = 1000
    x = jax.random.uniform(key, (N, 3), dtype=jnp.float32, minval=-1.0, maxval=1.0)

    out = anisotropic_encode(x, num_freqs=10, include_input=True, block_n=256)
    out = jax.block_until_ready(out)
    assert out.shape == (N, 63), out.shape
    ref = _reference(x, num_freqs=10, include_input=True)
    # Tolerance slightly relaxed vs 1e-4: cos rows are computed as sin(t + pi/2)
    # (phase fold), worst-case arg rounding at |t|~512 adds ~4e-5 abs error.
    np.testing.assert_allclose(np.asarray(out), np.asarray(ref), rtol=2e-4, atol=2e-4)

    # include_input=False branch, different freq count, default (clamped) block_n.
    N2 = 200
    x2 = jax.random.uniform(jax.random.PRNGKey(1), (N2, 3), dtype=jnp.float32,
                            minval=-1.0, maxval=1.0)
    out2 = jax.block_until_ready(
        anisotropic_encode(x2, num_freqs=6, include_input=False))
    assert out2.shape == (N2, 36), out2.shape
    ref2 = _reference(x2, num_freqs=6, include_input=False)
    np.testing.assert_allclose(np.asarray(out2), np.asarray(ref2), rtol=2e-4, atol=2e-4)

    # Feature-major output path (no trailing transpose).
    out3 = jax.block_until_ready(
        anisotropic_encode(x, num_freqs=10, include_input=True,
                           feature_major_output=True))
    assert out3.shape == (63, N), out3.shape
    np.testing.assert_allclose(np.asarray(out3.T), np.asarray(ref), rtol=2e-4, atol=2e-4)

    print("KERNEL_OK")
</pallas_src>

<mosaic_0001>
module attributes {stable_mosaic.version = 11 : i64} {
  func.func @kernel(%arg0: i32, %arg1: memref<63x1xf32, #tpu.memory_space<vmem>>, %arg2: memref<63x1xf32, #tpu.memory_space<vmem>>, %arg3: memref<3x256xf32, #tpu.memory_space<vmem>>, %arg4: memref<63x256xf32, #tpu.memory_space<vmem>>) attributes {dimension_semantics = [#tpu.dimension_semantics<parallel>], iteration_bounds = array<i64: 4>, scalar_prefetch = 0 : i64, scratch_operands = 0 : i64, tpu.core_type = #tpu.core_type<tc>, window_params = [{pipeline_mode = #tpu.pipeline_mode<synchronous>, transform_indices = @transform_0, window_bounds = array<i64: 63, 1>}, {pipeline_mode = #tpu.pipeline_mode<synchronous>, transform_indices = @transform_1, window_bounds = array<i64: 63, 1>}, {transform_indices = @transform_2, window_bounds = array<i64: 3, 256>}, {transform_indices = @transform_3, window_bounds = array<i64: 63, 256>}]} {
    %c0 = arith.constant 0 : index
    %c0_0 = arith.constant 0 : index
    %0 = vector.load %arg3[%c0, %c0_0] : memref<3x256xf32, #tpu.memory_space<vmem>>, vector<3x256xf32>
    %1 = tpu.concatenate %0, %0, %0, %0, %0, %0, %0, %0, %0, %0, %0, %0, %0, %0, %0, %0 in 0 : vector<3x256xf32>, vector<3x256xf32>, vector<3x256xf32>, vector<3x256xf32>, vector<3x256xf32>, vector<3x256xf32>, vector<3x256xf32>, vector<3x256xf32>, vector<3x256xf32>, vector<3x256xf32>, vector<3x256xf32>, vector<3x256xf32>, vector<3x256xf32>, vector<3x256xf32>, vector<3x256xf32>, vector<3x256xf32> -> vector<48x256xf32>
    %2 = tpu.concatenate %0, %0, %0, %0, %0 in 0 : vector<3x256xf32>, vector<3x256xf32>, vector<3x256xf32>, vector<3x256xf32>, vector<3x256xf32> -> vector<15x256xf32>
    %3 = tpu.concatenate %1, %2 in 0 : vector<48x256xf32>, vector<15x256xf32> -> vector<63x256xf32>
    %c0_1 = arith.constant 0 : index
    %c0_2 = arith.constant 0 : index
    %4 = vector.load %arg1[%c0_1, %c0_2] : memref<63x1xf32, #tpu.memory_space<vmem>>, vector<63x1xf32>
    %5 = vector.broadcast %4 : vector<63x1xf32> to vector<63x256xf32>
    %6 = arith.mulf %3, %5 : vector<63x256xf32>
    %c0_3 = arith.constant 0 : index
    %c0_4 = arith.constant 0 : index
    %7 = vector.load %arg2[%c0_3, %c0_4] : memref<63x1xf32, #tpu.memory_space<vmem>>, vector<63x1xf32>
    %8 = vector.broadcast %7 : vector<63x1xf32> to vector<63x256xf32>
    %9 = arith.addf %6, %8 : vector<63x256xf32>
    %10 = math.sin %9 : vector<63x256xf32>
    %11 = tpu.iota {dimensions = array<i32: 0>} : vector<63x256xi32>
    %c3_i32 = arith.constant 3 : i32
    %12 = vector.broadcast %c3_i32 : i32 to vector<63x256xi32>
    %13 = arith.cmpi slt, %11, %12 : vector<63x256xi32>
    %14 = arith.select %13, %9, %10 : vector<63x256xi1>, vector<63x256xf32>
    %c0_5 = arith.constant 0 : index
    %c0_6 = arith.constant 0 : index
    %15 = vector.load %arg4[%c0_5, %c0_6] : memref<63x256xf32, #tpu.memory_space<vmem>>, vector<63x256xf32>
    tpu.vector_store %arg4[%c0_5, %c0_6], %14 {strides = array<i32>} : memref<63x256xf32, #tpu.memory_space<vmem>>, vector<63x256xf32>,
    return
  }
  func.func @transform_0(%arg0: i32) -> (i32, i32) {
    %c0_i32 = arith.constant 0 : i32
    %c0_i32_0 = arith.constant 0 : i32
    %c0_i32_1 = arith.constant 0 : i32
    return %c0_i32, %c0_i32_0 : i32, i32
  }
  func.func @transform_1(%arg0: i32) -> (i32, i32) {
    %c0_i32 = arith.constant 0 : i32
    %c0_i32_0 = arith.constant 0 : i32
    %c0_i32_1 = arith.constant 0 : i32
    return %c0_i32, %c0_i32_0 : i32, i32
  }
  func.func @transform_2(%arg0: i32) -> (i32, i32) {
    %c0_i32 = arith.constant 0 : i32
    %c0_i32_0 = arith.constant 0 : i32
    return %c0_i32, %arg0 : i32, i32
  }
  func.func @transform_3(%arg0: i32) -> (i32, i32) {
    %c0_i32 = arith.constant 0 : i32
    %c0_i32_0 = arith.constant 0 : i32
    return %c0_i32, %arg0 : i32, i32
  }
}

</mosaic_0001>

<llo_original>
// kernel: tpu_custom_call.1
$region0: #{tpu_custom_call.1}
  #allocation0 [shape = 'u32[]', space=smem, size = 0x4, offset = 0x4, fixed_abs, tag = 'smem constant byte address 0x4 - core index']
  #allocation1 [shape = 'u32[144,128]{1,0:T(1,128)}', space=vmem, size = 0x12000, scoped, tag = 'internal scratch']
  %s0 = inlined_call_operand.vmem [shape: f32[63,1], index: 0, kind: input, shape index: {}]
  %s1 = inlined_call_operand.vmem [shape: f32[63,1], index: 1, kind: input, shape index: {}]
  %s2 = inlined_call_operand.vmem [shape: f32[3,1024], index: 2, kind: input, shape index: {}]
  %s3 = inlined_call_operand.hbm [shape: f32[63,1024], index: 3, kind: output, shape index: {}]
  %s4 = sld [smem:[#allocation0]]
  $region45: #{tpu_custom_call.1} parent=0
    _
  %s6 = ssub.s32 1, %s4
  %s7 = scalar_select 0, %s6, %s4
  $region1: #{tpu_custom_call.1} parent=0
    #allocation2 [shape = 'u8[131072]{0}', space=vmem, size = 0x20000, scoped, tag = 'output window, operand 0']
    #allocation3 [shape = 's32[2]{0}', space=sflag, size = 0x8, scoped, tag = 'scoped memory for tpu_custom_call.1']
    %8 = vsyncpa [#allocation3], 0
    %s9 = scalar_lea.sflag [#allocation3], 1
    %10 = vsyncpa %s9, 0
    loop: start=0, step=1, limit=6
    $region2: #{tpu_custom_call.1} parent=1 // loop_pre_header
      _
    $region3: #{tpu_custom_call.1} parent=1 // loop_header
      %s12 = sphi 0, %s16
      %p13 = scmp.ge.s32.totalorder %s12, 6
      %s20 = sphi 0, %s20
      %s22 = sphi 0, %s20
      %s23 = sphi 0, %s22
      %s37 = sphi 0, %s23
      %s41 = sphi 0, %s41
      %s43 = sphi 0, %s41
      %s44 = sphi 0, %s43
      %s58 = sphi 0, %s44
      %s64 = sphi 0, %s66
      %s67 = sphi 0, %s64
      %s68 = sphi 0, %s67
      %s84 = sphi 0, %s68
      %s90 = sphi 0, %s92
      %s93 = sphi 0, %s90
      %s94 = sphi 0, %s93
      %s110 = sphi 0, %s94
    $region4: #{tpu_custom_call.1} parent=1 // loop_header_branch
      %15 = sbr.rel (%p13) target = $region8
    $region5: #{tpu_custom_call.1} parent=1 // loop_body
      %s17 = ssub.s32 %s12, 1
      %s18 = ssub.s32 %s12, 2
      %s19 = sadd.s32 %s12, 1
      %s21 = sadd.s32 %s20, 1
      %p24 = scmp.eq.s32.totalorder %s12, 3
      %p25 = scmp.ne.s32.totalorder %s20, %s22
      %p26 = scmp.eq.s32.totalorder %s12, 0
      %p27 = por %p25, %p26
      %p28 = scmp.ne.s32.totalorder %s20, %s22
      %p29 = scmp.eq.s32.totalorder %s17, 3
      %p30 = por %p28, %p29
      %p31 = scmp.ne.s32.totalorder %s22, %s23
      %p32 = scmp.eq.s32.totalorder %s17, 0
      %p33 = por %p31, %p32
      %p34 = scmp.ne.s32.totalorder %s22, %s23
      %p35 = scmp.eq.s32.totalorder %s18, 3
      %p36 = por %p34, %p35
      %p38 = scmp.ne.s32.totalorder %s23, %s37
      %p39 = scmp.eq.s32.totalorder %s18, 0
      %p40 = por %p38, %p39
      %s42 = sadd.s32 %s41, 1
      %p45 = scmp.eq.s32.totalorder %s12, 3
      %p46 = scmp.ne.s32.totalorder %s41, %s43
      %p47 = scmp.eq.s32.totalorder %s12, 0
      %p48 = por %p46, %p47
      %p49 = scmp.ne.s32.totalorder %s41, %s43
      %p50 = scmp.eq.s32.totalorder %s17, 3
      %p51 = por %p49, %p50
      %p52 = scmp.ne.s32.totalorder %s43, %s44
      %p53 = scmp.eq.s32.totalorder %s17, 0
      %p54 = por %p52, %p53
      %p55 = scmp.ne.s32.totalorder %s43, %s44
      %p56 = scmp.eq.s32.totalorder %s18, 3
      %p57 = por %p55, %p56
      %p59 = scmp.ne.s32.totalorder %s44, %s58
      %p60 = scmp.eq.s32.totalorder %s18, 0
      %p61 = por %p59, %p60
      %s62 = ssub.s32 %s12, %s19
      %p63 = scmp.eq.s32.totalorder %s62, 0
      %s65 = sadd.s32 %s64, 1
      %s66 = scalar_select %p63, %s64, %s65
      %p69 = pneg %p63
      %p70 = scmp.eq.s32.totalorder %s12, 3
      %p71 = por %p69, %p70
      %p72 = scmp.ne.s32.totalorder %s64, %s67
      %p73 = scmp.eq.s32.totalorder %s12, 0
      %p74 = por %p72, %p73
      %p75 = scmp.ne.s32.totalorder %s64, %s67
      %p76 = scmp.eq.s32.totalorder %s17, 3
      %p77 = por %p75, %p76
      %p78 = scmp.ne.s32.totalorder %s67, %s68
      %p79 = scmp.eq.s32.totalorder %s17, 0
      %p80 = por %p78, %p79
      %p81 = scmp.ne.s32.totalorder %s67, %s68
      %p82 = scmp.eq.s32.totalorder %s18, 3
      %p83 = por %p81, %p82
      %p85 = scmp.ne.s32.totalorder %s68, %s84
      %p86 = scmp.eq.s32.totalorder %s18, 0
      %p87 = por %p85, %p86
      %s88 = ssub.s32 %s12, %s19
      %p89 = scmp.eq.s32.totalorder %s88, 0
      %s91 = sadd.s32 %s90, 1
      %s92 = scalar_select %p89, %s90, %s91
      %p95 = pneg %p89
      %p96 = scmp.eq.s32.totalorder %s12, 3
      %p97 = por %p95, %p96
      %p98 = scmp.ne.s32.totalorder %s90, %s93
      %p99 = scmp.eq.s32.totalorder %s12, 0
      %p100 = por %p98, %p99
      %p101 = scmp.ne.s32.totalorder %s90, %s93
      %p102 = scmp.eq.s32.totalorder %s17, 3
      %p103 = por %p101, %p102
      %p104 = scmp.ne.s32.totalorder %s93, %s94
      %p105 = scmp.eq.s32.totalorder %s17, 0
      %p106 = por %p104, %p105
      %p107 = scmp.ne.s32.totalorder %s93, %s94
      %p108 = scmp.eq.s32.totalorder %s18, 3
      %p109 = por %p107, %p108
      %p111 = scmp.ne.s32.totalorder %s94, %s110
      %p112 = scmp.eq.s32.totalorder %s18, 0
      %p113 = por %p111, %p112
      %p114 = scmp.le.s32.totalorder 1, %s12
      %p115 = scmp.lt.s32.totalorder %s12, 5
      %p116 = pnand %p114, %p115
      %p117 = pneg %p116
      // Predicated region
      $region9: #{tpu_custom_call.1} parent=5 // pred_check
        _
      $region10: #{tpu_custom_call.1} parent=5 // pred_check_branch
        %119 = sbr.rel (%p116) target = $region12
      $region11: #{tpu_custom_call.1} parent=5 // pred_region
        %s120 = ssub.s32 %s12, 1
        // Predicated region
        $region13: #{tpu_custom_call.1} parent=11 // pred_check
          %p121 = pneg %p33
        $region14: #{tpu_custom_call.1} parent=11 // pred_check_branch
          %123 = sbr.rel (%p121) target = $region16
        $region15: #{tpu_custom_call.1} parent=11 // pred_region
          _
        $region16: #{tpu_custom_call.1} parent=11 // pred_fallthru
          _
        // Predicated region
        $region17: #{tpu_custom_call.1} parent=11 // pred_check
          %p124 = pneg %p54
        $region18: #{tpu_custom_call.1} parent=11 // pred_check_branch
          %126 = sbr.rel (%p124) target = $region20
        $region19: #{tpu_custom_call.1} parent=11 // pred_region
          _
        $region20: #{tpu_custom_call.1} parent=11 // pred_fallthru
          _
      $region12: #{tpu_custom_call.1} parent=5 // pred_fallthru
        _
      %p127 = scmp.lt.s32.totalorder %s12, 4
      // Predicated region
      $region21: #{tpu_custom_call.1} parent=5 // pred_check
        %p128 = pneg %p127
      $region22: #{tpu_custom_call.1} parent=5 // pred_check_branch
        %130 = sbr.rel (%p128) target = $region24
      $region23: #{tpu_custom_call.1} parent=5 // pred_region
        // Predicated region
        $region25: #{tpu_custom_call.1} parent=23 // pred_check
          %p131 = pneg %p74
        $region26: #{tpu_custom_call.1} parent=23 // pred_check_branch
          %133 = sbr.rel (%p131) target = $region28
        $region27: #{tpu_custom_call.1} parent=23 // pred_region
          %s134 = smul.u32 2, %s12
          %p135 = scmp.lt.s32.totalorder %s134, 7
          %s136 = scalar_select %p135, %s134, 7
          %s137 = smul.addr %s136, 4
          %s138 = scalar_lea.vmem %s2, %s137
          %s139 = smul.u32 2, %s12
        $region28: #{tpu_custom_call.1} parent=23 // pred_fallthru
          _
      $region24: #{tpu_custom_call.1} parent=5 // pred_fallthru
        _
      %p140 = scmp.le.s32.totalorder 1, %s12
      %p141 = scmp.lt.s32.totalorder %s12, 5
      %p142 = pnand %p140, %p141
      %p143 = pneg %p142
      // Predicated region
      $region29: #{tpu_custom_call.1} parent=5 // pred_check
        _
      $region30: #{tpu_custom_call.1} parent=5 // pred_check_branch
        %145 = sbr.rel (%p142) target = $region32
      $region31: #{tpu_custom_call.1} parent=5 // pred_region
        %s146 = ssub.s32 %s12, 1
        %p147 = pneg %p33
        %p148 = pneg %p30
        %p149 = pneg %p54
        %p150 = pneg %p51
        %s151 = smul.u32 2, %s17
        %p152 = scmp.lt.s32.totalorder %s151, 7
        %s153 = scalar_select %p152, %s151, 7
        %s154 = smul.addr %s153, 4
        %s155 = scalar_lea.vmem %s2, %s154
        %p156 = pneg %p80
        %p157 = pneg %p77
        %p158 = pneg %p106
        %p159 = pneg %p103
        %s160 = sand.u32 %s93, 1
        %s161 = scalar_lea.sflag [#allocation3], %s160
        %s162 = sand.u32 %s93, 1
        %s163 = smul.addr %s162, 128
        %s164 = scalar_lea.vmem [#allocation2], %s163
        %s165 = smul.u32 2, %s17
        %p166 = scmp.lt.s32.totalorder %s165, 7
        %s167 = scalar_select %p166, %s165, 7
        %s168 = smul.addr %s167, 4
        %s169 = scalar_lea.vmem %s2, %s168
        %s170 = smul.u32 2, %s17
        %s171 = smul.u32 2, %s17
        %v172 = vld [vmem:[%s169] sm:$0x77]
        %v174 = vcombine.high %v172, %v172
        %v176 = vrot.slane %v172, 5
        %v177 = vrot.slane %v174, 5
        %v180 = vrot.slane %v172, 2
        %v181 = vrot.slane %v174, 2
        %v184 = vrot.slane %v172, 7
        %v185 = vrot.slane %v174, 7
        %v188 = vcombine.low %v172, %v172
        %v190 = vrot.slane %v172, 1
        %v191 = vrot.slane %v174, 1
        %v194 = vrot.slane %v172, 6
        %v195 = vrot.slane %v174, 6
        %v198 = vrot.slane %v172, 3
        %v199 = vrot.slane %v174, 3
        %vm202 = vcmask 1042432
        %v203 = vsel %vm202, %v172, %v176
        %v204 = vsel %vm202, %v174, %v177
        %vm205 = vcmask 1045504
        %v206 = vsel %vm205, %v203, %v180
        %v207 = vsel %vm205, %v204, %v181
        %vm208 = vcmask 1040384
        %v209 = vsel %vm208, %v180, %v184
        %v210 = vsel %vm208, %v181, %v185
        %vm211 = vcmask 1043456
        %v212 = vsel %vm211, %v209, %v188
        %v213 = vsel %vm211, %v210, %v172
        %vm214 = vcmask 1046528
        %v215 = vsel %vm214, %v212, %v190
        %v216 = vsel %vm214, %v213, %v191
        %vm217 = vcmask 1041408
        %v218 = vsel %vm217, %v190, %v194
        %v219 = vsel %vm217, %v191, %v195
        %vm220 = vcmask 1044480
        %v221 = vsel %vm220, %v218, %v198
        %v222 = vsel %vm220, %v219, %v199
        %v223 = vld [vmem:[%s0] sm:$0xff]
        %v224 = vld [vmem:[%s0 + $0x8] sm:$0xff]
        %v225 = vld [vmem:[%s0 + $0x10] sm:$0xff]
        %v226 = vld [vmem:[%s0 + $0x18] sm:$0xff]
        %v227 = vld [vmem:[%s0 + $0x20] sm:$0xff]
        %v228 = vld [vmem:[%s0 + $0x28] sm:$0xff]
        %v229 = vld [vmem:[%s0 + $0x30] sm:$0xff]
        %v230 = vld [vmem:[%s0 + $0x38] sm:$0x7f]
        %232 = vset.pattern.permute.xlu0 0
        %233 = vperm.xlu0 %232, %v223
        %v234 = vpop.permute.xlu0 %233
        %237 = vset.pattern.permute.xlu0 0
        %238 = vperm.xlu0 %237, %v224
        %v239 = vpop.permute.xlu0 %238
        %242 = vset.pattern.permute.xlu0 0
        %243 = vperm.xlu0 %242, %v225
        %v244 = vpop.permute.xlu0 %243
        %247 = vset.pattern.permute.xlu0 0
        %248 = vperm.xlu0 %247, %v226
        %v249 = vpop.permute.xlu0 %248
        %252 = vset.pattern.permute.xlu0 0
        %253 = vperm.xlu0 %252, %v227
        %v254 = vpop.permute.xlu0 %253
        %257 = vset.pattern.permute.xlu0 0
        %258 = vperm.xlu0 %257, %v228
        %v259 = vpop.permute.xlu0 %258
        %262 = vset.pattern.permute.xlu0 0
        %263 = vperm.xlu0 %262, %v229
        %v264 = vpop.permute.xlu0 %263
        %267 = vset.pattern.permute.xlu0 0
        %268 = vperm.xlu0 %267, %v230
        %v269 = vpop.permute.xlu0 %268
        %v271 = vmul.f32 %v206, %v234
        %v272 = vmul.f32 %v207, %v234
        %v273 = vmul.f32 %v215, %v239
        %v274 = vmul.f32 %v216, %v239
        %v275 = vmul.f32 %v221, %v244
        %v276 = vmul.f32 %v222, %v244
        %v277 = vmul.f32 %v206, %v249
        %v278 = vmul.f32 %v207, %v249
        %v279 = vmul.f32 %v215, %v254
        %v280 = vmul.f32 %v216, %v254
        %v281 = vmul.f32 %v221, %v259
        %v282 = vmul.f32 %v222, %v259
        %v283 = vmul.f32 %v206, %v264
        %v284 = vmul.f32 %v207, %v264
        %v285 = vmul.f32 %v212, %v269
        %v286 = vmul.f32 %v213, %v269
        %v287 = vld [vmem:[%s1] sm:$0xff]
        %v288 = vld [vmem:[%s1 + $0x8] sm:$0xff]
        %v289 = vld [vmem:[%s1 + $0x10] sm:$0xff]
        %v290 = vld [vmem:[%s1 + $0x18] sm:$0xff]
        %v291 = vld [vmem:[%s1 + $0x20] sm:$0xff]
        %v292 = vld [vmem:[%s1 + $0x28] sm:$0xff]
        %v293 = vld [vmem:[%s1 + $0x30] sm:$0xff]
        %v294 = vld [vmem:[%s1 + $0x38] sm:$0x7f]
        %296 = vset.pattern.permute.xlu0 0
        %297 = vperm.xlu0 %296, %v287
        %v298 = vpop.permute.xlu0 %297
        %301 = vset.pattern.permute.xlu0 0
        %302 = vperm.xlu0 %301, %v288
        %v303 = vpop.permute.xlu0 %302
        %306 = vset.pattern.permute.xlu0 0
        %307 = vperm.xlu0 %306, %v289
        %v308 = vpop.permute.xlu0 %307
        %311 = vset.pattern.permute.xlu0 0
        %312 = vperm.xlu0 %311, %v290
        %v313 = vpop.permute.xlu0 %312
        %316 = vset.pattern.permute.xlu0 0
        %317 = vperm.xlu0 %316, %v291
        %v318 = vpop.permute.xlu0 %317
        %321 = vset.pattern.permute.xlu0 0
        %322 = vperm.xlu0 %321, %v292
        %v323 = vpop.permute.xlu0 %322
        %326 = vset.pattern.permute.xlu0 0
        %327 = vperm.xlu0 %326, %v293
        %v328 = vpop.permute.xlu0 %327
        %331 = vset.pattern.permute.xlu0 0
        %332 = vperm.xlu0 %331, %v294
        %v333 = vpop.permute.xlu0 %332
        %v335 = vadd.f32 %v271, %v298
        %v336 = vadd.f32 %v272, %v298
        %v337 = vadd.f32 %v273, %v303
        %v338 = vadd.f32 %v274, %v303
        %v339 = vadd.f32 %v275, %v308
        %v340 = vadd.f32 %v276, %v308
        %v341 = vadd.f32 %v277, %v313
        %v342 = vadd.f32 %v278, %v313
        %v343 = vadd.f32 %v279, %v318
        %v344 = vadd.f32 %v280, %v318
        %v345 = vadd.f32 %v281, %v323
        %v346 = vadd.f32 %v282, %v323
        %v347 = vadd.f32 %v283, %v328
        %v348 = vadd.f32 %v284, %v328
        %v349 = vadd.f32 %v285, %v333
        %v350 = vadd.f32 %v286, %v333
        %v351 = vand.u32 2147483647, %v335
        %vm352 = vcmp.le.f32.partialorder %v351, 0.7853982
        %vm353 = vcmp.lt.s32.totalorder %v335, 0
        %v354 = vand.u32 %v335, 2139095040
        %v355 = vshrl.u32 %v354, 23
        %v356 = vsub.s32 %v355, 127
        %v357 = vand.u32 2147483647, %v335
        %v358 = vand.u32 %v357, 8388607
        %v359 = vor.u32 %v358, 8388608
        %v360 = vsub.s32 0, %v359
        %v361 = vadd.s32 %v356, 1
        %vm362 = vcmp.gt.s32.totalorder %v361, 0
        %v363 = vsel %vm362, %v361, 0
        %v364 = vshrl.u32 %v363, 5
        %v365 = vand.u32 %v363, 31
        %v366 = vsub.s32 32, %v365
        %v367 = vshrl.u32 683565275, %v366
        %v368 = vshll.u32 683565275, %v365
        %v369 = vshrl.u32 2475754826, %v366
        %v370 = vor.u32 %v368, %v369
        %v371 = vshll.u32 2475754826, %v365
        %v372 = vshrl.u32 2131351028, %v366
        %v373 = vor.u32 %v371, %v372
        %v374 = vshll.u32 2131351028, %v365
        %v375 = vshrl.u32 2102212464, %v366
        %v376 = vor.u32 %v374, %v375
        %v377 = vshll.u32 2102212464, %v365
        %v378 = vshrl.u32 920167782, %v366
        %v379 = vor.u32 %v377, %v378
        %v380 = vshll.u32 920167782, %v365
        %v381 = vshrl.u32 1326507024, %v366
        %v382 = vor.u32 %v380, %v381
        %vm383 = vcmp.lt.s32.totalorder %v364, 1
        %vm384 = vcmp.lt.s32.totalorder %v364, 2
        %vm385 = vcmp.lt.s32.totalorder %v364, 3
        %vm386 = vcmp.lt.s32.totalorder %v364, 4
        %v387 = vsel %vm383, %v367, %v370
        %v388 = vsel %vm386, %v376, 2102212464
        %v389 = vsel %vm385, %v373, %v388
        %v390 = vsel %vm384, %v387, %v389
        %v391 = vsel %vm383, %v370, %v373
        %v392 = vsel %vm386, %v379, 920167782
        %v393 = vsel %vm385, %v376, %v392
        %v394 = vsel %vm384, %v391, %v393
        %v395 = vsel %vm383, %v373, %v376
        %v396 = vsel %vm386, %v382, 1326507024
        %v397 = vsel %vm385, %v379, %v396
        %v398 = vsel %vm384, %v395, %v397
        %v399 = vshll.u32 %v359, 8
        %v400 = vmul.u32.u64.compose %v399, %v398
        %v401 = vextract.low.u32 %v400
        %v402 = vextract.high.u32 %v400
        %v403 = vmul.u32.u64.compose %v399, %v394
        %v404 = vextract.low.u32 %v403
        %v405 = vextract.high.u32 %v403
        %v406 = vmul.u32 %v399, %v390
        %v407 = vadd.s32 %v402, %v404
        %vm408 = vc.u32 %v402, %v404
        %v409 = vadd.s32 %v405, 1
        %v410 = vsel %vm408, %v409, %v405
        %v411 = vadd.s32 %v406, %v410
        %v412 = vadd.s32 %v411, 536870912
        %v413 = vshrl.u32 %v412, 30
        %v414 = vshll.u32 %v413, 30
        %v415 = vsub.s32 %v411, %v414
        %vm416 = vcmp.lt.s32.totalorder %v415, 0
        %v417 = vsub.s32 0, %v415
        %v418 = vsel %vm416, %v417, %v415
        %v419 = vclz %v418
        %v420 = vsub.s32 %v419, 2
        %vm421 = vcmp.gt.s32.totalorder 0, %v420
        %v422 = vsel %vm421, 0, %v420
        %v423 = vsub.s32 32, %v422
        %v424 = vshll.u32 %v415, %v422
        %v425 = vshrl.u32 %v407, %v423
        %v426 = vor.u32 %v424, %v425
        %v427 = vsub.s32 4294967266, %v422
        %v428 = vadd.s32 %v427, 127
        %v429 = vshll.u32 %v428, 23
        %v430 = vor.u32 4788187, %v429
        %v431 = vand.u32 2147483647, %v430
        %v433 = vcvt.s32.f32 %v426
        %v434 = vmul.f32 %v433, %v431
        %v435 = vxor.u32 %v434, 2147483648
        %v436 = vsel %vm353, %v435, %v434
        %v437 = vsub.s32 4, %v413
        %v438 = vsel %vm353, %v437, %v413
        %v439 = vsel %vm352, %v335, %v436
        %v440 = vsel %vm352, 0, %v438
        %v441 = vcosq.f32.pop %v439
        %v442 = vsinq.f32.pop %v439
        %vm443 = vweird.f32 %v335
        %v444 = vadd.s32 %v440, 3
        %v445 = vand.u32 %v444, 3
        %vm446 = vcmp.lt.s32.totalorder %v445, 2
        %vm447 = vcmp.eq.s32.totalorder %v445, 0
        %v448 = vxor.u32 %v442, 2147483648
        %v449 = vsel %vm447, %v441, %v448
        %vm450 = vcmp.eq.s32.totalorder %v445, 2
        %v451 = vxor.u32 %v441, 2147483648
        %v452 = vsel %vm450, %v451, %v442
        %v453 = vsel %vm446, %v449, %v452
        %v454 = vsel %vm443, nan, %v453
        %v455 = vand.u32 2147483647, %v336
        %vm456 = vcmp.le.f32.partialorder %v455, 0.7853982
        %vm457 = vcmp.lt.s32.totalorder %v336, 0
        %v458 = vand.u32 %v336, 2139095040
        %v459 = vshrl.u32 %v458, 23
        %v460 = vsub.s32 %v459, 127
        %v461 = vand.u32 2147483647, %v336
        %v462 = vand.u32 %v461, 8388607
        %v463 = vor.u32 %v462, 8388608
        %v464 = vsub.s32 0, %v463
        %v465 = vadd.s32 %v460, 1
        %vm466 = vcmp.gt.s32.totalorder %v465, 0
        %v467 = vsel %vm466, %v465, 0
        %v468 = vshrl.u32 %v467, 5
        %v469 = vand.u32 %v467, 31
        %v470 = vsub.s32 32, %v469
        %v471 = vshrl.u32 683565275, %v470
        %v472 = vshll.u32 683565275, %v469
        %v473 = vshrl.u32 2475754826, %v470
        %v474 = vor.u32 %v472, %v473
        %v475 = vshll.u32 2475754826, %v469
        %v476 = vshrl.u32 2131351028, %v470
        %v477 = vor.u32 %v475, %v476
        %v478 = vshll.u32 2131351028, %v469
        %v479 = vshrl.u32 2102212464, %v470
        %v480 = vor.u32 %v478, %v479
        %v481 = vshll.u32 2102212464, %v469
        %v482 = vshrl.u32 920167782, %v470
        %v483 = vor.u32 %v481, %v482
        %v484 = vshll.u32 920167782, %v469
        %v485 = vshrl.u32 1326507024, %v470
        %v486 = vor.u32 %v484, %v485
        %vm487 = vcmp.lt.s32.totalorder %v468, 1
        %vm488 = vcmp.lt.s32.totalorder %v468, 2
        %vm489 = vcmp.lt.s32.totalorder %v468, 3
        %vm490 = vcmp.lt.s32.totalorder %v468, 4
        %v491 = vsel %vm487, %v471, %v474
        %v492 = vsel %vm490, %v480, 2102212464
        %v493 = vsel %vm489, %v477, %v492
        %v494 = vsel %vm488, %v491, %v493
        %v495 = vsel %vm487, %v474, %v477
        %v496 = vsel %vm490, %v483, 920167782
        %v497 = vsel %vm489, %v480, %v496
        %v498 = vsel %vm488, %v495, %v497
        %v499 = vsel %vm487, %v477, %v480
        %v500 = vsel %vm490, %v486, 1326507024
        %v501 = vsel %vm489, %v483, %v500
        %v502 = vsel %vm488, %v499, %v501
        %v503 = vshll.u32 %v463, 8
        %v504 = vmul.u32.u64.compose %v503, %v502
        %v505 = vextract.low.u32 %v504
        %v506 = vextract.high.u32 %v504
        %v507 = vmul.u32.u64.compose %v503, %v498
        %v508 = vextract.low.u32 %v507
        %v509 = vextract.high.u32 %v507
        %v510 = vmul.u32 %v503, %v494
        %v511 = vadd.s32 %v506, %v508
        %vm512 = vc.u32 %v506, %v508
        %v513 = vadd.s32 %v509, 1
        %v514 = vsel %vm512, %v513, %v509
        %v515 = vadd.s32 %v510, %v514
        %v516 = vadd.s32 %v515, 536870912
        %v517 = vshrl.u32 %v516, 30
        %v518 = vshll.u32 %v517, 30
        %v519 = vsub.s32 %v515, %v518
        %vm520 = vcmp.lt.s32.totalorder %v519, 0
        %v521 = vsub.s32 0, %v519
        %v522 = vsel %vm520, %v521, %v519
        %v523 = vclz %v522
        %v524 = vsub.s32 %v523, 2
        %vm525 = vcmp.gt.s32.totalorder 0, %v524
        %v526 = vsel %vm525, 0, %v524
        %v527 = vsub.s32 32, %v526
        %v528 = vshll.u32 %v519, %v526
        %v529 = vshrl.u32 %v511, %v527
        %v530 = vor.u32 %v528, %v529
        %v531 = vsub.s32 4294967266, %v526
        %v532 = vadd.s32 %v531, 127
        %v533 = vshll.u32 %v532, 23
        %v534 = vor.u32 4788187, %v533
        %v535 = vand.u32 2147483647, %v534
        %v537 = vcvt.s32.f32 %v530
        %v538 = vmul.f32 %v537, %v535
        %v539 = vxor.u32 %v538, 2147483648
        %v540 = vsel %vm457, %v539, %v538
        %v541 = vsub.s32 4, %v517
        %v542 = vsel %vm457, %v541, %v517
        %v543 = vsel %vm456, %v336, %v540
        %v544 = vsel %vm456, 0, %v542
        %v545 = vcosq.f32.pop %v543
        %v546 = vsinq.f32.pop %v543
        %vm547 = vweird.f32 %v336
        %v548 = vadd.s32 %v544, 3
        %v549 = vand.u32 %v548, 3
        %vm550 = vcmp.lt.s32.totalorder %v549, 2
        %vm551 = vcmp.eq.s32.totalorder %v549, 0
        %v552 = vxor.u32 %v546, 2147483648
        %v553 = vsel %vm551, %v545, %v552
        %vm554 = vcmp.eq.s32.totalorder %v549, 2
        %v555 = vxor.u32 %v545, 2147483648
        %v556 = vsel %vm554, %v555, %v546
        %v557 = vsel %vm550, %v553, %v556
        %v558 = vsel %vm547, nan, %v557
        %v559 = vand.u32 2147483647, %v337
        %vm560 = vcmp.le.f32.partialorder %v559, 0.7853982
        %vm561 = vcmp.lt.s32.totalorder %v337, 0
        %v562 = vand.u32 %v337, 2139095040
        %v563 = vshrl.u32 %v562, 23
        %v564 = vsub.s32 %v563, 127
        %v565 = vand.u32 2147483647, %v337
        %v566 = vand.u32 %v565, 8388607
        %v567 = vor.u32 %v566, 8388608
        %v568 = vsub.s32 0, %v567
        %v569 = vadd.s32 %v564, 1
        %vm570 = vcmp.gt.s32.totalorder %v569, 0
        %v571 = vsel %vm570, %v569, 0
        %v572 = vshrl.u32 %v571, 5
        %v573 = vand.u32 %v571, 31
        %v574 = vsub.s32 32, %v573
        %v575 = vshrl.u32 683565275, %v574
        %v576 = vshll.u32 683565275, %v573
        %v577 = vshrl.u32 2475754826, %v574
        %v578 = vor.u32 %v576, %v577
        %v579 = vshll.u32 2475754826, %v573
        %v580 = vshrl.u32 2131351028, %v574
        %v581 = vor.u32 %v579, %v580
        %v582 = vshll.u32 2131351028, %v573
        %v583 = vshrl.u32 2102212464, %v574
        %v584 = vor.u32 %v582, %v583
        %v585 = vshll.u32 2102212464, %v573
        %v586 = vshrl.u32 920167782, %v574
        %v587 = vor.u32 %v585, %v586
        %v588 = vshll.u32 920167782, %v573
        %v589 = vshrl.u32 1326507024, %v574
        %v590 = vor.u32 %v588, %v589
        %vm591 = vcmp.lt.s32.totalorder %v572, 1
        %vm592 = vcmp.lt.s32.totalorder %v572, 2
        %vm593 = vcmp.lt.s32.totalorder %v572, 3
        %vm594 = vcmp.lt.s32.totalorder %v572, 4
        %v595 = vsel %vm591, %v575, %v578
        %v596 = vsel %vm594, %v584, 2102212464
        %v597 = vsel %vm593, %v581, %v596
        %v598 = vsel %vm592, %v595, %v597
        %v599 = vsel %vm591, %v578, %v581
        %v600 = vsel %vm594, %v587, 920167782
        %v601 = vsel %vm593, %v584, %v600
        %v602 = vsel %vm592, %v599, %v601
        %v603 = vsel %vm591, %v581, %v584
        %v604 = vsel %vm594, %v590, 1326507024
        %v605 = vsel %vm593, %v587, %v604
        %v606 = vsel %vm592, %v603, %v605
        %v607 = vshll.u32 %v567, 8
        %v608 = vmul.u32.u64.compose %v607, %v606
        %v609 = vextract.low.u32 %v608
        %v610 = vextract.high.u32 %v608
        %v611 = vmul.u32.u64.compose %v607, %v602
        %v612 = vextract.low.u32 %v611
        %v613 = vextract.high.u32 %v611
        %v614 = vmul.u32 %v607, %v598
        %v615 = vadd.s32 %v610, %v612
        %vm616 = vc.u32 %v610, %v612
        %v617 = vadd.s32 %v613, 1
        %v618 = vsel %vm616, %v617, %v613
        %v619 = vadd.s32 %v614, %v618
        %v620 = vadd.s32 %v619, 536870912
        %v621 = vshrl.u32 %v620, 30
        %v622 = vshll.u32 %v621, 30
        %v623 = vsub.s32 %v619, %v622
        %vm624 = vcmp.lt.s32.totalorder %v623, 0
        %v625 = vsub.s32 0, %v623
        %v626 = vsel %vm624, %v625, %v623
        %v627 = vclz %v626
        %v628 = vsub.s32 %v627, 2
        %vm629 = vcmp.gt.s32.totalorder 0, %v628
        %v630 = vsel %vm629, 0, %v628
        %v631 = vsub.s32 32, %v630
        %v632 = vshll.u32 %v623, %v630
        %v633 = vshrl.u32 %v615, %v631
        %v634 = vor.u32 %v632, %v633
        %v635 = vsub.s32 4294967266, %v630
        %v636 = vadd.s32 %v635, 127
        %v637 = vshll.u32 %v636, 23
        %v638 = vor.u32 4788187, %v637
        %v639 = vand.u32 2147483647, %v638
        %v641 = vcvt.s32.f32 %v634
        %v642 = vmul.f32 %v641, %v639
        %v643 = vxor.u32 %v642, 2147483648
        %v644 = vsel %vm561, %v643, %v642
        %v645 = vsub.s32 4, %v621
        %v646 = vsel %vm561, %v645, %v621
        %v647 = vsel %vm560, %v337, %v644
        %v648 = vsel %vm560, 0, %v646
        %v649 = vcosq.f32.pop %v647
        %v650 = vsinq.f32.pop %v647
        %vm651 = vweird.f32 %v337
        %v652 = vadd.s32 %v648, 3
        %v653 = vand.u32 %v652, 3
        %vm654 = vcmp.lt.s32.totalorder %v653, 2
        %vm655 = vcmp.eq.s32.totalorder %v653, 0
        %v656 = vxor.u32 %v650, 2147483648
        %v657 = vsel %vm655, %v649, %v656
        %vm658 = vcmp.eq.s32.totalorder %v653, 2
        %v659 = vxor.u32 %v649, 2147483648
        %v660 = vsel %vm658, %v659, %v650
        %v661 = vsel %vm654, %v657, %v660
        %v662 = vsel %vm651, nan, %v661
        %v663 = vand.u32 2147483647, %v338
        %vm664 = vcmp.le.f32.partialorder %v663, 0.7853982
        %vm665 = vcmp.lt.s32.totalorder %v338, 0
        %v666 = vand.u32 %v338, 2139095040
        %v667 = vshrl.u32 %v666, 23
        %v668 = vsub.s32 %v667, 127
        %v669 = vand.u32 2147483647, %v338
        %v670 = vand.u32 %v669, 8388607
        %v671 = vor.u32 %v670, 8388608
        %v672 = vsub.s32 0, %v671
        %v673 = vadd.s32 %v668, 1
        %vm674 = vcmp.gt.s32.totalorder %v673, 0
        %v675 = vsel %vm674, %v673, 0
        %v676 = vshrl.u32 %v675, 5
        %v677 = vand.u32 %v675, 31
        %v678 = vsub.s32 32, %v677
        %v679 = vshrl.u32 683565275, %v678
        %v680 = vshll.u32 683565275, %v677
        %v681 = vshrl.u32 2475754826, %v678
        %v682 = vor.u32 %v680, %v681
        %v683 = vshll.u32 2475754826, %v677
        %v684 = vshrl.u32 2131351028, %v678
        %v685 = vor.u32 %v683, %v684
        %v686 = vshll.u32 2131351028, %v677
        %v687 = vshrl.u32 2102212464, %v678
        %v688 = vor.u32 %v686, %v687
        %v689 = vshll.u32 2102212464, %v677
        %v690 = vshrl.u32 920167782, %v678
        %v691 = vor.u32 %v689, %v690
        %v692 = vshll.u32 920167782, %v677
        %v693 = vshrl.u32 1326507024, %v678
        %v694 = vor.u32 %v692, %v693
        %vm695 = vcmp.lt.s32.totalorder %v676, 1
        %vm696 = vcmp.lt.s32.totalorder %v676, 2
        %vm697 = vcmp.lt.s32.totalorder %v676, 3
        %vm698 = vcmp.lt.s32.totalorder %v676, 4
        %v699 = vsel %vm695, %v679, %v682
        %v700 = vsel %vm698, %v688, 2102212464
        %v701 = vsel %vm697, %v685, %v700
        %v702 = vsel %vm696, %v699, %v701
        %v703 = vsel %vm695, %v682, %v685
        %v704 = vsel %vm698, %v691, 920167782
        %v705 = vsel %vm697, %v688, %v704
        %v706 = vsel %vm696, %v703, %v705
        %v707 = vsel %vm695, %v685, %v688
        %v708 = vsel %vm698, %v694, 1326507024
        %v709 = vsel %vm697, %v691, %v708
        %v710 = vsel %vm696, %v707, %v709
        %v711 = vshll.u32 %v671, 8
        %v712 = vmul.u32.u64.compose %v711, %v710
        %v713 = vextract.low.u32 %v712
        %v714 = vextract.high.u32 %v712
        %v715 = vmul.u32.u64.compose %v711, %v706
        %v716 = vextract.low.u32 %v715
        %v717 = vextract.high.u32 %v715
        %v718 = vmul.u32 %v711, %v702
        %v719 = vadd.s32 %v714, %v716
        %vm720 = vc.u32 %v714, %v716
        %v721 = vadd.s32 %v717, 1
        %v722 = vsel %vm720, %v721, %v717
        %v723 = vadd.s32 %v718, %v722
        %v724 = vadd.s32 %v723, 536870912
        %v725 = vshrl.u32 %v724, 30
        %v726 = vshll.u32 %v725, 30
        %v727 = vsub.s32 %v723, %v726
        %vm728 = vcmp.lt.s32.totalorder %v727, 0
        %v729 = vsub.s32 0, %v727
        %v730 = vsel %vm728, %v729, %v727
        %v731 = vclz %v730
        %v732 = vsub.s32 %v731, 2
        %vm733 = vcmp.gt.s32.totalorder 0, %v732
        %v734 = vsel %vm733, 0, %v732
        %v735 = vsub.s32 32, %v734
        %v736 = vshll.u32 %v727, %v734
        %v737 = vshrl.u32 %v719, %v735
        %v738 = vor.u32 %v736, %v737
        %v739 = vsub.s32 4294967266, %v734
        %v740 = vadd.s32 %v739, 127
        %v741 = vshll.u32 %v740, 23
        %v742 = vor.u32 4788187, %v741
        %v743 = vand.u32 2147483647, %v742
        %v745 = vcvt.s32.f32 %v738
        %v746 = vmul.f32 %v745, %v743
        %v747 = vxor.u32 %v746, 2147483648
        %v748 = vsel %vm665, %v747, %v746
        %v749 = vsub.s32 4, %v725
        %v750 = vsel %vm665, %v749, %v725
        %v751 = vsel %vm664, %v338, %v748
        %v752 = vsel %vm664, 0, %v750
        %v753 = vcosq.f32.pop %v751
        %v754 = vsinq.f32.pop %v751
        %vm755 = vweird.f32 %v338
        %v756 = vadd.s32 %v752, 3
        %v757 = vand.u32 %v756, 3
        %vm758 = vcmp.lt.s32.totalorder %v757, 2
        %vm759 = vcmp.eq.s32.totalorder %v757, 0
        %v760 = vxor.u32 %v754, 2147483648
        %v761 = vsel %vm759, %v753, %v760
        %vm762 = vcmp.eq.s32.totalorder %v757, 2
        %v763 = vxor.u32 %v753, 2147483648
        %v764 = vsel %vm762, %v763, %v754
        %v765 = vsel %vm758, %v761, %v764
        %v766 = vsel %vm755, nan, %v765
        %v767 = vand.u32 2147483647, %v339
        %vm768 = vcmp.le.f32.partialorder %v767, 0.7853982
        %vm769 = vcmp.lt.s32.totalorder %v339, 0
        %v770 = vand.u32 %v339, 2139095040
        %v771 = vshrl.u32 %v770, 23
        %v772 = vsub.s32 %v771, 127
        %v773 = vand.u32 2147483647, %v339
        %v774 = vand.u32 %v773, 8388607
        %v775 = vor.u32 %v774, 8388608
        %v776 = vsub.s32 0, %v775
        %v777 = vadd.s32 %v772, 1
        %vm778 = vcmp.gt.s32.totalorder %v777, 0
        %v779 = vsel %vm778, %v777, 0
        %v780 = vshrl.u32 %v779, 5
        %v781 = vand.u32 %v779, 31
        %v782 = vsub.s32 32, %v781
        %v783 = vshrl.u32 683565275, %v782
        %v784 = vshll.u32 683565275, %v781
        %v785 = vshrl.u32 2475754826, %v782
        %v786 = vor.u32 %v784, %v785
        %v787 = vshll.u32 2475754826, %v781
        %v788 = vshrl.u32 2131351028, %v782
        %v789 = vor.u32 %v787, %v788
        %v790 = vshll.u32 2131351028, %v781
        %v791 = vshrl.u32 2102212464, %v782
        %v792 = vor.u32 %v790, %v791
        %v793 = vshll.u32 2102212464, %v781
        %v794 = vshrl.u32 920167782, %v782
        %v795 = vor.u32 %v793, %v794
        %v796 = vshll.u32 920167782, %v781
        %v797 = vshrl.u32 1326507024, %v782
        %v798 = vor.u32 %v796, %v797
        %vm799 = vcmp.lt.s32.totalorder %v780, 1
        %vm800 = vcmp.lt.s32.totalorder %v780, 2
        %vm801 = vcmp.lt.s32.totalorder %v780, 3
        %vm802 = vcmp.lt.s32.totalorder %v780, 4
        %v803 = vsel %vm799, %v783, %v786
        %v804 = vsel %vm802, %v792, 2102212464
        %v805 = vsel %vm801, %v789, %v804
        %v806 = vsel %vm800, %v803, %v805
        %v807 = vsel %vm799, %v786, %v789
        %v808 = vsel %vm802, %v795, 920167782
        %v809 = vsel %vm801, %v792, %v808
        %v810 = vsel %vm800, %v807, %v809
        %v811 = vsel %vm799, %v789, %v792
        %v812 = vsel %vm802, %v798, 1326507024
        %v813 = vsel %vm801, %v795, %v812
        %v814 = vsel %vm800, %v811, %v813
        %v815 = vshll.u32 %v775, 8
        %v816 = vmul.u32.u64.compose %v815, %v814
        %v817 = vextract.low.u32 %v816
        %v818 = vextract.high.u32 %v816
        %v819 = vmul.u32.u64.compose %v815, %v810
        %v820 = vextract.low.u32 %v819
        %v821 = vextract.high.u32 %v819
        %v822 = vmul.u32 %v815, %v806
        %v823 = vadd.s32 %v818, %v820
        %vm824 = vc.u32 %v818, %v820
        %v825 = vadd.s32 %v821, 1
        %v826 = vsel %vm824, %v825, %v821
        %v827 = vadd.s32 %v822, %v826
        %v828 = vadd.s32 %v827, 536870912
        %v829 = vshrl.u32 %v828, 30
        %v830 = vshll.u32 %v829, 30
        %v831 = vsub.s32 %v827, %v830
        %vm832 = vcmp.lt.s32.totalorder %v831, 0
        %v833 = vsub.s32 0, %v831
        %v834 = vsel %vm832, %v833, %v831
        %v835 = vclz %v834
        %v836 = vsub.s32 %v835, 2
        %vm837 = vcmp.gt.s32.totalorder 0, %v836
        %v838 = vsel %vm837, 0, %v836
        %v839 = vsub.s32 32, %v838
        %v840 = vshll.u32 %v831, %v838
        %v841 = vshrl.u32 %v823, %v839
        %v842 = vor.u32 %v840, %v841
        %v843 = vsub.s32 4294967266, %v838
        %v844 = vadd.s32 %v843, 127
        %v845 = vshll.u32 %v844, 23
        %v846 = vor.u32 4788187, %v845
        %v847 = vand.u32 2147483647, %v846
        %v849 = vcvt.s32.f32 %v842
        %v850 = vmul.f32 %v849, %v847
        %v851 = vxor.u32 %v850, 2147483648
        %v852 = vsel %vm769, %v851, %v850
        %v853 = vsub.s32 4, %v829
        %v854 = vsel %vm769, %v853, %v829
        %v855 = vsel %vm768, %v339, %v852
        %v856 = vsel %vm768, 0, %v854
        %v857 = vcosq.f32.pop %v855
        %v858 = vsinq.f32.pop %v855
        %vm859 = vweird.f32 %v339
        %v860 = vadd.s32 %v856, 3
        %v861 = vand.u32 %v860, 3
        %vm862 = vcmp.lt.s32.totalorder %v861, 2
        %vm863 = vcmp.eq.s32.totalorder %v861, 0
        %v864 = vxor.u32 %v858, 2147483648
        %v865 = vsel %vm863, %v857, %v864
        %vm866 = vcmp.eq.s32.totalorder %v861, 2
        %v867 = vxor.u32 %v857, 2147483648
        %v868 = vsel %vm866, %v867, %v858
        %v869 = vsel %vm862, %v865, %v868
        %v870 = vsel %vm859, nan, %v869
        %v871 = vand.u32 2147483647, %v340
        %vm872 = vcmp.le.f32.partialorder %v871, 0.7853982
        %vm873 = vcmp.lt.s32.totalorder %v340, 0
        %v874 = vand.u32 %v340, 2139095040
        %v875 = vshrl.u32 %v874, 23
        %v876 = vsub.s32 %v875, 127
        %v877 = vand.u32 2147483647, %v340
        %v878 = vand.u32 %v877, 8388607
        %v879 = vor.u32 %v878, 8388608
        %v880 = vsub.s32 0, %v879
        %v881 = vadd.s32 %v876, 1
        %vm882 = vcmp.gt.s32.totalorder %v881, 0
        %v883 = vsel %vm882, %v881, 0
        %v884 = vshrl.u32 %v883, 5
        %v885 = vand.u32 %v883, 31
        %v886 = vsub.s32 32, %v885
        %v887 = vshrl.u32 683565275, %v886
        %v888 = vshll.u32 683565275, %v885
        %v889 = vshrl.u32 2475754826, %v886
        %v890 = vor.u32 %v888, %v889
        %v891 = vshll.u32 2475754826, %v885
        %v892 = vshrl.u32 2131351028, %v886
        %v893 = vor.u32 %v891, %v892
        %v894 = vshll.u32 2131351028, %v885
        %v895 = vshrl.u32 2102212464, %v886
        %v896 = vor.u32 %v894, %v895
        %v897 = vshll.u32 2102212464, %v885
        %v898 = vshrl.u32 920167782, %v886
        %v899 = vor.u32 %v897, %v898
        %v900 = vshll.u32 920167782, %v885
        %v901 = vshrl.u32 1326507024, %v886
        %v902 = vor.u32 %v900, %v901
        %vm903 = vcmp.lt.s32.totalorder %v884, 1
        %vm904 = vcmp.lt.s32.totalorder %v884, 2
        %vm905 = vcmp.lt.s32.totalorder %v884, 3
        %vm906 = vcmp.lt.s32.totalorder %v884, 4
        %v907 = vsel %vm903, %v887, %v890
        %v908 = vsel %vm906, %v896, 2102212464
        %v909 = vsel %vm905, %v893, %v908
        %v910 = vsel %vm904, %v907, %v909
        %v911 = vsel %vm903, %v890, %v893
        %v912 = vsel %vm906, %v899, 920167782
        %v913 = vsel %vm905, %v896, %v912
        %v914 = vsel %vm904, %v911, %v913
        %v915 = vsel %vm903, %v893, %v896
        %v916 = vsel %vm906, %v902, 1326507024
        %v917 = vsel %vm905, %v899, %v916
        %v918 = vsel %vm904, %v915, %v917
        %v919 = vshll.u32 %v879, 8
        %v920 = vmul.u32.u64.compose %v919, %v918
        %v921 = vextract.low.u32 %v920
        %v922 = vextract.high.u32 %v920
        %v923 = vmul.u32.u64.compose %v919, %v914
        %v924 = vextract.low.u32 %v923
        %v925 = vextract.high.u32 %v923
        %v926 = vmul.u32 %v919, %v910
        %v927 = vadd.s32 %v922, %v924
        %vm928 = vc.u32 %v922, %v924
        %v929 = vadd.s32 %v925, 1
        %v930 = vsel %vm928, %v929, %v925
        %v931 = vadd.s32 %v926, %v930
        %v932 = vadd.s32 %v931, 536870912
        %v933 = vshrl.u32 %v932, 30
        %v934 = vshll.u32 %v933, 30
        %v935 = vsub.s32 %v931, %v934
        %vm936 = vcmp.lt.s32.totalorder %v935, 0
        %v937 = vsub.s32 0, %v935
        %v938 = vsel %vm936, %v937, %v935
        %v939 = vclz %v938
        %v940 = vsub.s32 %v939, 2
        %vm941 = vcmp.gt.s32.totalorder 0, %v940
        %v942 = vsel %vm941, 0, %v940
        %v943 = vsub.s32 32, %v942
        %v944 = vshll.u32 %v935, %v942
        %v945 = vshrl.u32 %v927, %v943
        %v946 = vor.u32 %v944, %v945
        %v947 = vsub.s32 4294967266, %v942
        %v948 = vadd.s32 %v947, 127
        %v949 = vshll.u32 %v948, 23
        %v950 = vor.u32 4788187, %v949
        %v951 = vand.u32 2147483647, %v950
        %v953 = vcvt.s32.f32 %v946
        %v954 = vmul.f32 %v953, %v951
        %v955 = vxor.u32 %v954, 2147483648
        %v956 = vsel %vm873, %v955, %v954
        %v957 = vsub.s32 4, %v933
        %v958 = vsel %vm873, %v957, %v933
        %v959 = vsel %vm872, %v340, %v956
        %v960 = vsel %vm872, 0, %v958
        %v961 = vcosq.f32.pop %v959
        %v962 = vsinq.f32.pop %v959
        %vm963 = vweird.f32 %v340
        %v964 = vadd.s32 %v960, 3
        %v965 = vand.u32 %v964, 3
        %vm966 = vcmp.lt.s32.totalorder %v965, 2
        %vm967 = vcmp.eq.s32.totalorder %v965, 0
        %v968 = vxor.u32 %v962, 2147483648
        %v969 = vsel %vm967, %v961, %v968
        %vm970 = vcmp.eq.s32.totalorder %v965, 2
        %v971 = vxor.u32 %v961, 2147483648
        %v972 = vsel %vm970, %v971, %v962
        %v973 = vsel %vm966, %v969, %v972
        %v974 = vsel %vm963, nan, %v973
        %v975 = vand.u32 2147483647, %v341
        %vm976 = vcmp.le.f32.partialorder %v975, 0.7853982
        %vm977 = vcmp.lt.s32.totalorder %v341, 0
        %v978 = vand.u32 %v341, 2139095040
        %v979 = vshrl.u32 %v978, 23
        %v980 = vsub.s32 %v979, 127
        %v981 = vand.u32 2147483647, %v341
        %v982 = vand.u32 %v981, 8388607
        %v983 = vor.u32 %v982, 8388608
        %v984 = vsub.s32 0, %v983
        %v985 = vadd.s32 %v980, 1
        %vm986 = vcmp.gt.s32.totalorder %v985, 0
        %v987 = vsel %vm986, %v985, 0
        %v988 = vshrl.u32 %v987, 5
        %v989 = vand.u32 %v987, 31
        %v990 = vsub.s32 32, %v989
        %v991 = vshrl.u32 683565275, %v990
        %v992 = vshll.u32 683565275, %v989
        %v993 = vshrl.u32 2475754826, %v990
        %v994 = vor.u32 %v992, %v993
        %v995 = vshll.u32 2475754826, %v989
        %v996 = vshrl.u32 2131351028, %v990
        %v997 = vor.u32 %v995, %v996
        %v998 = vshll.u32 2131351028, %v989
        %v999 = vshrl.u32 2102212464, %v990
        %v1000 = vor.u32 %v998, %v999
        %v1001 = vshll.u32 2102212464, %v989
        %v1002 = vshrl.u32 920167782, %v990
        %v1003 = vor.u32 %v1001, %v1002
        %v1004 = vshll.u32 920167782, %v989
        %v1005 = vshrl.u32 1326507024, %v990
        %v1006 = vor.u32 %v1004, %v1005
        %vm1007 = vcmp.lt.s32.totalorder %v988, 1
        %vm1008 = vcmp.lt.s32.totalorder %v988, 2
        %vm1009 = vcmp.lt.s32.totalorder %v988, 3
        %vm1010 = vcmp.lt.s32.totalorder %v988, 4
        %v1011 = vsel %vm1007, %v991, %v994
        %v1012 = vsel %vm1010, %v1000, 2102212464
        %v1013 = vsel %vm1009, %v997, %v1012
        %v1014 = vsel %vm1008, %v1011, %v1013
        %v1015 = vsel %vm1007, %v994, %v997
        %v1016 = vsel %vm1010, %v1003, 920167782
        %v1017 = vsel %vm1009, %v1000, %v1016
        %v1018 = vsel %vm1008, %v1015, %v1017
        %v1019 = vsel %vm1007, %v997, %v1000
        %v1020 = vsel %vm1010, %v1006, 1326507024
        %v1021 = vsel %vm1009, %v1003, %v1020
        %v1022 = vsel %vm1008, %v1019, %v1021
        %v1023 = vshll.u32 %v983, 8
        %v1024 = vmul.u32.u64.compose %v1023, %v1022
        %v1025 = vextract.low.u32 %v1024
        %v1026 = vextract.high.u32 %v1024
        %v1027 = vmul.u32.u64.compose %v1023, %v1018
        %v1028 = vextract.low.u32 %v1027
        %v1029 = vextract.high.u32 %v1027
        %v1030 = vmul.u32 %v1023, %v1014
        %v1031 = vadd.s32 %v1026, %v1028
        %vm1032 = vc.u32 %v1026, %v1028
        %v1033 = vadd.s32 %v1029, 1
        %v1034 = vsel %vm1032, %v1033, %v1029
        %v1035 = vadd.s32 %v1030, %v1034
        %v1036 = vadd.s32 %v1035, 536870912
        %v1037 = vshrl.u32 %v1036, 30
        %v1038 = vshll.u32 %v1037, 30
        %v1039 = vsub.s32 %v1035, %v1038
        %vm1040 = vcmp.lt.s32.totalorder %v1039, 0
        %v1041 = vsub.s32 0, %v1039
        %v1042 = vsel %vm1040, %v1041, %v1039
        %v1043 = vclz %v1042
        %v1044 = vsub.s32 %v1043, 2
        %vm1045 = vcmp.gt.s32.totalorder 0, %v1044
        %v1046 = vsel %vm1045, 0, %v1044
        %v1047 = vsub.s32 32, %v1046
        %v1048 = vshll.u32 %v1039, %v1046
        %v1049 = vshrl.u32 %v1031, %v1047
        %v1050 = vor.u32 %v1048, %v1049
        %v1051 = vsub.s32 4294967266, %v1046
        %v1052 = vadd.s32 %v1051, 127
        %v1053 = vshll.u32 %v1052, 23
        %v1054 = vor.u32 4788187, %v1053
        %v1055 = vand.u32 2147483647, %v1054
        %v1057 = vcvt.s32.f32 %v1050
        %v1058 = vmul.f32 %v1057, %v1055
        %v1059 = vxor.u32 %v1058, 2147483648
        %v1060 = vsel %vm977, %v1059, %v1058
        %v1061 = vsub.s32 4, %v1037
        %v1062 = vsel %vm977, %v1061, %v1037
        %v1063 = vsel %vm976, %v341, %v1060
        %v1064 = vsel %vm976, 0, %v1062
        %v1065 = vcosq.f32.pop %v1063
        %v1066 = vsinq.f32.pop %v1063
        %vm1067 = vweird.f32 %v341
        %v1068 = vadd.s32 %v1064, 3
        %v1069 = vand.u32 %v1068, 3
        %vm1070 = vcmp.lt.s32.totalorder %v1069, 2
        %vm1071 = vcmp.eq.s32.totalorder %v1069, 0
        %v1072 = vxor.u32 %v1066, 2147483648
        %v1073 = vsel %vm1071, %v1065, %v1072
        %vm1074 = vcmp.eq.s32.totalorder %v1069, 2
        %v1075 = vxor.u32 %v1065, 2147483648
        %v1076 = vsel %vm1074, %v1075, %v1066
        %v1077 = vsel %vm1070, %v1073, %v1076
        %v1078 = vsel %vm1067, nan, %v1077
        %v1079 = vand.u32 2147483647, %v342
        %vm1080 = vcmp.le.f32.partialorder %v1079, 0.7853982
        %vm1081 = vcmp.lt.s32.totalorder %v342, 0
        %v1082 = vand.u32 %v342, 2139095040
        %v1083 = vshrl.u32 %v1082, 23
        %v1084 = vsub.s32 %v1083, 127
        %v1085 = vand.u32 2147483647, %v342
        %v1086 = vand.u32 %v1085, 8388607
        %v1087 = vor.u32 %v1086, 8388608
        %v1088 = vsub.s32 0, %v1087
        %v1089 = vadd.s32 %v1084, 1
        %vm1090 = vcmp.gt.s32.totalorder %v1089, 0
        %v1091 = vsel %vm1090, %v1089, 0
        %v1092 = vshrl.u32 %v1091, 5
        %v1093 = vand.u32 %v1091, 31
        %v1094 = vsub.s32 32, %v1093
        %v1095 = vshrl.u32 683565275, %v1094
        %v1096 = vshll.u32 683565275, %v1093
        %v1097 = vshrl.u32 2475754826, %v1094
        %v1098 = vor.u32 %v1096, %v1097
        %v1099 = vshll.u32 2475754826, %v1093
        %v1100 = vshrl.u32 2131351028, %v1094
        %v1101 = vor.u32 %v1099, %v1100
        %v1102 = vshll.u32 2131351028, %v1093
        %v1103 = vshrl.u32 2102212464, %v1094
        %v1104 = vor.u32 %v1102, %v1103
        %v1105 = vshll.u32 2102212464, %v1093
        %v1106 = vshrl.u32 920167782, %v1094
        %v1107 = vor.u32 %v1105, %v1106
        %v1108 = vshll.u32 920167782, %v1093
        %v1109 = vshrl.u32 1326507024, %v1094
        %v1110 = vor.u32 %v1108, %v1109
        %vm1111 = vcmp.lt.s32.totalorder %v1092, 1
        %vm1112 = vcmp.lt.s32.totalorder %v1092, 2
        %vm1113 = vcmp.lt.s32.totalorder %v1092, 3
        %vm1114 = vcmp.lt.s32.totalorder %v1092, 4
        %v1115 = vsel %vm1111, %v1095, %v1098
        %v1116 = vsel %vm1114, %v1104, 2102212464
        %v1117 = vsel %vm1113, %v1101, %v1116
        %v1118 = vsel %vm1112, %v1115, %v1117
        %v1119 = vsel %vm1111, %v1098, %v1101
        %v1120 = vsel %vm1114, %v1107, 920167782
        %v1121 = vsel %vm1113, %v1104, %v1120
        %v1122 = vsel %vm1112, %v1119, %v1121
        %v1123 = vsel %vm1111, %v1101, %v1104
        %v1124 = vsel %vm1114, %v1110, 1326507024
        %v1125 = vsel %vm1113, %v1107, %v1124
        %v1126 = vsel %vm1112, %v1123, %v1125
        %v1127 = vshll.u32 %v1087, 8
        %v1128 = vmul.u32.u64.compose %v1127, %v1126
        %v1129 = vextract.low.u32 %v1128
        %v1130 = vextract.high.u32 %v1128
        %v1131 = vmul.u32.u64.compose %v1127, %v1122
        %v1132 = vextract.low.u32 %v1131
        %v1133 = vextract.high.u32 %v1131
        %v1134 = vmul.u32 %v1127, %v1118
        %v1135 = vadd.s32 %v1130, %v1132
        %vm1136 = vc.u32 %v1130, %v1132
        %v1137 = vadd.s32 %v1133, 1
        %v1138 = vsel %vm1136, %v1137, %v1133
        %v1139 = vadd.s32 %v1134, %v1138
        %v1140 = vadd.s32 %v1139, 536870912
        %v1141 = vshrl.u32 %v1140, 30
        %v1142 = vshll.u32 %v1141, 30
        %v1143 = vsub.s32 %v1139, %v1142
        %vm1144 = vcmp.lt.s32.totalorder %v1143, 0
        %v1145 = vsub.s32 0, %v1143
        %v1146 = vsel %vm1144, %v1145, %v1143
        %v1147 = vclz %v1146
        %v1148 = vsub.s32 %v1147, 2
        %vm1149 = vcmp.gt.s32.totalorder 0, %v1148
        %v1150 = vsel %vm1149, 0, %v1148
        %v1151 = vsub.s32 32, %v1150
        %v1152 = vshll.u32 %v1143, %v1150
        %v1153 = vshrl.u32 %v1135, %v1151
        %v1154 = vor.u32 %v1152, %v1153
        %v1155 = vsub.s32 4294967266, %v1150
        %v1156 = vadd.s32 %v1155, 127
        %v1157 = vshll.u32 %v1156, 23
        %v1158 = vor.u32 4788187, %v1157
        %v1159 = vand.u32 2147483647, %v1158
        %v1161 = vcvt.s32.f32 %v1154
        %v1162 = vmul.f32 %v1161, %v1159
        %v1163 = vxor.u32 %v1162, 2147483648
        %v1164 = vsel %vm1081, %v1163, %v1162
        %v1165 = vsub.s32 4, %v1141
        %v1166 = vsel %vm1081, %v1165, %v1141
        %v1167 = vsel %vm1080, %v342, %v1164
        %v1168 = vsel %vm1080, 0, %v1166
        %v1169 = vcosq.f32.pop %v1167
        %v1170 = vsinq.f32.pop %v1167
        %vm1171 = vweird.f32 %v342
        %v1172 = vadd.s32 %v1168, 3
        %v1173 = vand.u32 %v1172, 3
        %vm1174 = vcmp.lt.s32.totalorder %v1173, 2
        %vm1175 = vcmp.eq.s32.totalorder %v1173, 0
        %v1176 = vxor.u32 %v1170, 2147483648
        %v1177 = vsel %vm1175, %v1169, %v1176
        %vm1178 = vcmp.eq.s32.totalorder %v1173, 2
        %v1179 = vxor.u32 %v1169, 2147483648
        %v1180 = vsel %vm1178, %v1179, %v1170
        %v1181 = vsel %vm1174, %v1177, %v1180
        %v1182 = vsel %vm1171, nan, %v1181
        %v1183 = vand.u32 2147483647, %v343
        %vm1184 = vcmp.le.f32.partialorder %v1183, 0.7853982
        %vm1185 = vcmp.lt.s32.totalorder %v343, 0
        %v1186 = vand.u32 %v343, 2139095040
        %v1187 = vshrl.u32 %v1186, 23
        %v1188 = vsub.s32 %v1187, 127
        %v1189 = vand.u32 2147483647, %v343
        %v1190 = vand.u32 %v1189, 8388607
        %v1191 = vor.u32 %v1190, 8388608
        %v1192 = vsub.s32 0, %v1191
        %v1193 = vadd.s32 %v1188, 1
        %vm1194 = vcmp.gt.s32.totalorder %v1193, 0
        %v1195 = vsel %vm1194, %v1193, 0
        %v1196 = vshrl.u32 %v1195, 5
        %v1197 = vand.u32 %v1195, 31
        %v1198 = vsub.s32 32, %v1197
        %v1199 = vshrl.u32 683565275, %v1198
        %v1200 = vshll.u32 683565275, %v1197
        %v1201 = vshrl.u32 2475754826, %v1198
        %v1202 = vor.u32 %v1200, %v1201
        %v1203 = vshll.u32 2475754826, %v1197
        %v1204 = vshrl.u32 2131351028, %v1198
        %v1205 = vor.u32 %v1203, %v1204
        %v1206 = vshll.u32 2131351028, %v1197
        %v1207 = vshrl.u32 2102212464, %v1198
        %v1208 = vor.u32 %v1206, %v1207
        %v1209 = vshll.u32 2102212464, %v1197
        %v1210 = vshrl.u32 920167782, %v1198
        %v1211 = vor.u32 %v1209, %v1210
        %v1212 = vshll.u32 920167782, %v1197
        %v1213 = vshrl.u32 1326507024, %v1198
        %v1214 = vor.u32 %v1212, %v1213
        %vm1215 = vcmp.lt.s32.totalorder %v1196, 1
        %vm1216 = vcmp.lt.s32.totalorder %v1196, 2
        %vm1217 = vcmp.lt.s32.totalorder %v1196, 3
        %vm1218 = vcmp.lt.s32.totalorder %v1196, 4
        %v1219 = vsel %vm1215, %v1199, %v1202
        %v1220 = vsel %vm1218, %v1208, 2102212464
        %v1221 = vsel %vm1217, %v1205, %v1220
        %v1222 = vsel %vm1216, %v1219, %v1221
        %v1223 = vsel %vm1215, %v1202, %v1205
        %v1224 = vsel %vm1218, %v1211, 920167782
        %v1225 = vsel %vm1217, %v1208, %v1224
        %v1226 = vsel %vm1216, %v1223, %v1225
        %v1227 = vsel %vm1215, %v1205, %v1208
        %v1228 = vsel %vm1218, %v1214, 1326507024
        %v1229 = vsel %vm1217, %v1211, %v1228
        %v1230 = vsel %vm1216, %v1227, %v1229
        %v1231 = vshll.u32 %v1191, 8
        %v1232 = vmul.u32.u64.compose %v1231, %v1230
        %v1233 = vextract.low.u32 %v1232
        %v1234 = vextract.high.u32 %v1232
        %v1235 = vmul.u32.u64.compose %v1231, %v1226
        %v1236 = vextract.low.u32 %v1235
        %v1237 = vextract.high.u32 %v1235
        %v1238 = vmul.u32 %v1231, %v1222
        %v1239 = vadd.s32 %v1234, %v1236
        %vm1240 = vc.u32 %v1234, %v1236
        %v1241 = vadd.s32 %v1237, 1
        %v1242 = vsel %vm1240, %v1241, %v1237
        %v1243 = vadd.s32 %v1238, %v1242
        %v1244 = vadd.s32 %v1243, 536870912
        %v1245 = vshrl.u32 %v1244, 30
        %v1246 = vshll.u32 %v1245, 30
        %v1247 = vsub.s32 %v1243, %v1246
        %vm1248 = vcmp.lt.s32.totalorder %v1247, 0
        %v1249 = vsub.s32 0, %v1247
        %v1250 = vsel %vm1248, %v1249, %v1247
        %v1251 = vclz %v1250
        %v1252 = vsub.s32 %v1251, 2
        %vm1253 = vcmp.gt.s32.totalorder 0, %v1252
        %v1254 = vsel %vm1253, 0, %v1252
        %v1255 = vsub.s32 32, %v1254
        %v1256 = vshll.u32 %v1247, %v1254
        %v1257 = vshrl.u32 %v1239, %v1255
        %v1258 = vor.u32 %v1256, %v1257
        %v1259 = vsub.s32 4294967266, %v1254
        %v1260 = vadd.s32 %v1259, 127
        %v1261 = vshll.u32 %v1260, 23
        %v1262 = vor.u32 4788187, %v1261
        %v1263 = vand.u32 2147483647, %v1262
        %v1265 = vcvt.s32.f32 %v1258
        %v1266 = vmul.f32 %v1265, %v1263
        %v1267 = vxor.u32 %v1266, 2147483648
        %v1268 = vsel %vm1185, %v1267, %v1266
        %v1269 = vsub.s32 4, %v1245
        %v1270 = vsel %vm1185, %v1269, %v1245
        %v1271 = vsel %vm1184, %v343, %v1268
        %v1272 = vsel %vm1184, 0, %v1270
        %v1273 = vcosq.f32.pop %v1271
        %v1274 = vsinq.f32.pop %v1271
        %vm1275 = vweird.f32 %v343
        %v1276 = vadd.s32 %v1272, 3
        %v1277 = vand.u32 %v1276, 3
        %vm1278 = vcmp.lt.s32.totalorder %v1277, 2
        %vm1279 = vcmp.eq.s32.totalorder %v1277, 0
        %v1280 = vxor.u32 %v1274, 2147483648
        %v1281 = vsel %vm1279, %v1273, %v1280
        %vm1282 = vcmp.eq.s32.totalorder %v1277, 2
        %v1283 = vxor.u32 %v1273, 2147483648
        %v1284 = vsel %vm1282, %v1283, %v1274
        %v1285 = vsel %vm1278, %v1281, %v1284
        %v1286 = vsel %vm1275, nan, %v1285
        %v1287 = vand.u32 2147483647, %v344
        %vm1288 = vcmp.le.f32.partialorder %v1287, 0.7853982
        %vm1289 = vcmp.lt.s32.totalorder %v344, 0
        %v1290 = vand.u32 %v344, 2139095040
        %v1291 = vshrl.u32 %v1290, 23
        %v1292 = vsub.s32 %v1291, 127
        %v1293 = vand.u32 2147483647, %v344
        %v1294 = vand.u32 %v1293, 8388607
        %v1295 = vor.u32 %v1294, 8388608
        %v1296 = vsub.s32 0, %v1295
        %v1297 = vadd.s32 %v1292, 1
        %vm1298 = vcmp.gt.s32.totalorder %v1297, 0
        %v1299 = vsel %vm1298, %v1297, 0
        %v1300 = vshrl.u32 %v1299, 5
        %v1301 = vand.u32 %v1299, 31
        %v1302 = vsub.s32 32, %v1301
        %v1303 = vshrl.u32 683565275, %v1302
        %v1304 = vshll.u32 683565275, %v1301
        %v1305 = vshrl.u32 2475754826, %v1302
        %v1306 = vor.u32 %v1304, %v1305
        %v1307 = vshll.u32 2475754826, %v1301
        %v1308 = vshrl.u32 2131351028, %v1302
        %v1309 = vor.u32 %v1307, %v1308
        %v1310 = vshll.u32 2131351028, %v1301
        %v1311 = vshrl.u32 2102212464, %v1302
        %v1312 = vor.u32 %v1310, %v1311
        %v1313 = vshll.u32 2102212464, %v1301
        %v1314 = vshrl.u32 920167782, %v1302
        %v1315 = vor.u32 %v1313, %v1314
        %v1316 = vshll.u32 920167782, %v1301
        %v1317 = vshrl.u32 1326507024, %v1302
        %v1318 = vor.u32 %v1316, %v1317
        %vm1319 = vcmp.lt.s32.totalorder %v1300, 1
        %vm1320 = vcmp.lt.s32.totalorder %v1300, 2
        %vm1321 = vcmp.lt.s32.totalorder %v1300, 3
        %vm1322 = vcmp.lt.s32.totalorder %v1300, 4
        %v1323 = vsel %vm1319, %v1303, %v1306
        %v1324 = vsel %vm1322, %v1312, 2102212464
        %v1325 = vsel %vm1321, %v1309, %v1324
        %v1326 = vsel %vm1320, %v1323, %v1325
        %v1327 = vsel %vm1319, %v1306, %v1309
        %v1328 = vsel %vm1322, %v1315, 920167782
        %v1329 = vsel %vm1321, %v1312, %v1328
        %v1330 = vsel %vm1320, %v1327, %v1329
        %v1331 = vsel %vm1319, %v1309, %v1312
        %v1332 = vsel %vm1322, %v1318, 1326507024
        %v1333 = vsel %vm1321, %v1315, %v1332
        %v1334 = vsel %vm1320, %v1331, %v1333
        %v1335 = vshll.u32 %v1295, 8
        %v1336 = vmul.u32.u64.compose %v1335, %v1334
        %v1337 = vextract.low.u32 %v1336
        %v1338 = vextract.high.u32 %v1336
        %v1339 = vmul.u32.u64.compose %v1335, %v1330
        %v1340 = vextract.low.u32 %v1339
        %v1341 = vextract.high.u32 %v1339
        %v1342 = vmul.u32 %v1335, %v1326
        %v1343 = vadd.s32 %v1338, %v1340
        %vm1344 = vc.u32 %v1338, %v1340
        %v1345 = vadd.s32 %v1341, 1
        %v1346 = vsel %vm1344, %v1345, %v1341
        %v1347 = vadd.s32 %v1342, %v1346
        %v1348 = vadd.s32 %v1347, 536870912
        %v1349 = vshrl.u32 %v1348, 30
        %v1350 = vshll.u32 %v1349, 30
        %v1351 = vsub.s32 %v1347, %v1350
        %vm1352 = vcmp.lt.s32.totalorder %v1351, 0
        %v1353 = vsub.s32 0, %v1351
        %v1354 = vsel %vm1352, %v1353, %v1351
        %v1355 = vclz %v1354
        %v1356 = vsub.s32 %v1355, 2
        %vm1357 = vcmp.gt.s32.totalorder 0, %v1356
        %v1358 = vsel %vm1357, 0, %v1356
        %v1359 = vsub.s32 32, %v1358
        %v1360 = vshll.u32 %v1351, %v1358
        %v1361 = vshrl.u32 %v1343, %v1359
        %v1362 = vor.u32 %v1360, %v1361
        %v1363 = vsub.s32 4294967266, %v1358
        %v1364 = vadd.s32 %v1363, 127
        %v1365 = vshll.u32 %v1364, 23
        %v1366 = vor.u32 4788187, %v1365
        %v1367 = vand.u32 2147483647, %v1366
        %v1369 = vcvt.s32.f32 %v1362
        %v1370 = vmul.f32 %v1369, %v1367
        %v1371 = vxor.u32 %v1370, 2147483648
        %v1372 = vsel %vm1289, %v1371, %v1370
        %v1373 = vsub.s32 4, %v1349
        %v1374 = vsel %vm1289, %v1373, %v1349
        %v1375 = vsel %vm1288, %v344, %v1372
        %v1376 = vsel %vm1288, 0, %v1374
        %v1377 = vcosq.f32.pop %v1375
        %v1378 = vsinq.f32.pop %v1375
        %vm1379 = vweird.f32 %v344
        %v1380 = vadd.s32 %v1376, 3
        %v1381 = vand.u32 %v1380, 3
        %vm1382 = vcmp.lt.s32.totalorder %v1381, 2
        %vm1383 = vcmp.eq.s32.totalorder %v1381, 0
        %v1384 = vxor.u32 %v1378, 2147483648
        %v1385 = vsel %vm1383, %v1377, %v1384
        %vm1386 = vcmp.eq.s32.totalorder %v1381, 2
        %v1387 = vxor.u32 %v1377, 2147483648
        %v1388 = vsel %vm1386, %v1387, %v1378
        %v1389 = vsel %vm1382, %v1385, %v1388
        %v1390 = vsel %vm1379, nan, %v1389
        %v1391 = vand.u32 2147483647, %v345
        %vm1392 = vcmp.le.f32.partialorder %v1391, 0.7853982
        %vm1393 = vcmp.lt.s32.totalorder %v345, 0
        %v1394 = vand.u32 %v345, 2139095040
        %v1395 = vshrl.u32 %v1394, 23
        %v1396 = vsub.s32 %v1395, 127
        %v1397 = vand.u32 2147483647, %v345
        %v1398 = vand.u32 %v1397, 8388607
        %v1399 = vor.u32 %v1398, 8388608
        %v1400 = vsub.s32 0, %v1399
        %v1401 = vadd.s32 %v1396, 1
        %vm1402 = vcmp.gt.s32.totalorder %v1401, 0
        %v1403 = vsel %vm1402, %v1401, 0
        %v1404 = vshrl.u32 %v1403, 5
        %v1405 = vand.u32 %v1403, 31
        %v1406 = vsub.s32 32, %v1405
        %v1407 = vshrl.u32 683565275, %v1406
        %v1408 = vshll.u32 683565275, %v1405
        %v1409 = vshrl.u32 2475754826, %v1406
        %v1410 = vor.u32 %v1408, %v1409
        %v1411 = vshll.u32 2475754826, %v1405
        %v1412 = vshrl.u32 2131351028, %v1406
        %v1413 = vor.u32 %v1411, %v1412
        %v1414 = vshll.u32 2131351028, %v1405
        %v1415 = vshrl.u32 2102212464, %v1406
        %v1416 = vor.u32 %v1414, %v1415
        %v1417 = vshll.u32 2102212464, %v1405
        %v1418 = vshrl.u32 920167782, %v1406
        %v1419 = vor.u32 %v1417, %v1418
        %v1420 = vshll.u32 920167782, %v1405
        %v1421 = vshrl.u32 1326507024, %v1406
        %v1422 = vor.u32 %v1420, %v1421
        %vm1423 = vcmp.lt.s32.totalorder %v1404, 1
        %vm1424 = vcmp.lt.s32.totalorder %v1404, 2
        %vm1425 = vcmp.lt.s32.totalorder %v1404, 3
        %vm1426 = vcmp.lt.s32.totalorder %v1404, 4
        %v1427 = vsel %vm1423, %v1407, %v1410
        %v1428 = vsel %vm1426, %v1416, 2102212464
        %v1429 = vsel %vm1425, %v1413, %v1428
        %v1430 = vsel %vm1424, %v1427, %v1429
        %v1431 = vsel %vm1423, %v1410, %v1413
        %v1432 = vsel %vm1426, %v1419, 920167782
        %v1433 = vsel %vm1425, %v1416, %v1432
        %v1434 = vsel %vm1424, %v1431, %v1433
        %v1435 = vsel %vm1423, %v1413, %v1416
        %v1436 = vsel %vm1426, %v1422, 1326507024
        %v1437 = vsel %vm1425, %v1419, %v1436
        %v1438 = vsel %vm1424, %v1435, %v1437
        %v1439 = vshll.u32 %v1399, 8
        %v1440 = vmul.u32.u64.compose %v1439, %v1438
        %v1441 = vextract.low.u32 %v1440
        %v1442 = vextract.high.u32 %v1440
        %v1443 = vmul.u32.u64.compose %v1439, %v1434
        %v1444 = vextract.low.u32 %v1443
        %v1445 = vextract.high.u32 %v1443
        %v1446 = vmul.u32 %v1439, %v1430
        %v1447 = vadd.s32 %v1442, %v1444
        %vm1448 = vc.u32 %v1442, %v1444
        %v1449 = vadd.s32 %v1445, 1
        %v1450 = vsel %vm1448, %v1449, %v1445
        %v1451 = vadd.s32 %v1446, %v1450
        %v1452 = vadd.s32 %v1451, 536870912
        %v1453 = vshrl.u32 %v1452, 30
        %v1454 = vshll.u32 %v1453, 30
        %v1455 = vsub.s32 %v1451, %v1454
        %vm1456 = vcmp.lt.s32.totalorder %v1455, 0
        %v1457 = vsub.s32 0, %v1455
        %v1458 = vsel %vm1456, %v1457, %v1455
        %v1459 = vclz %v1458
        %v1460 = vsub.s32 %v1459, 2
        %vm1461 = vcmp.gt.s32.totalorder 0, %v1460
        %v1462 = vsel %vm1461, 0, %v1460
        %v1463 = vsub.s32 32, %v1462
        %v1464 = vshll.u32 %v1455, %v1462
        %v1465 = vshrl.u32 %v1447, %v1463
        %v1466 = vor.u32 %v1464, %v1465
        %v1467 = vsub.s32 4294967266, %v1462
        %v1468 = vadd.s32 %v1467, 127
        %v1469 = vshll.u32 %v1468, 23
        %v1470 = vor.u32 4788187, %v1469
        %v1471 = vand.u32 2147483647, %v1470
        %v1473 = vcvt.s32.f32 %v1466
        %v1474 = vmul.f32 %v1473, %v1471
        %v1475 = vxor.u32 %v1474, 2147483648
        %v1476 = vsel %vm1393, %v1475, %v1474
        %v1477 = vsub.s32 4, %v1453
        %v1478 = vsel %vm1393, %v1477, %v1453
        %v1479 = vsel %vm1392, %v345, %v1476
        %v1480 = vsel %vm1392, 0, %v1478
        %v1481 = vcosq.f32.pop %v1479
        %v1482 = vsinq.f32.pop %v1479
        %vm1483 = vweird.f32 %v345
        %v1484 = vadd.s32 %v1480, 3
        %v1485 = vand.u32 %v1484, 3
        %vm1486 = vcmp.lt.s32.totalorder %v1485, 2
        %vm1487 = vcmp.eq.s32.totalorder %v1485, 0
        %v1488 = vxor.u32 %v1482, 2147483648
        %v1489 = vsel %vm1487, %v1481, %v1488
        %vm1490 = vcmp.eq.s32.totalorder %v1485, 2
        %v1491 = vxor.u32 %v1481, 2147483648
        %v1492 = vsel %vm1490, %v1491, %v1482
        %v1493 = vsel %vm1486, %v1489, %v1492
        %v1494 = vsel %vm1483, nan, %v1493
        %v1495 = vand.u32 2147483647, %v346
        %vm1496 = vcmp.le.f32.partialorder %v1495, 0.7853982
        %vm1497 = vcmp.lt.s32.totalorder %v346, 0
        %v1498 = vand.u32 %v346, 2139095040
        %v1499 = vshrl.u32 %v1498, 23
        %v1500 = vsub.s32 %v1499, 127
        %v1501 = vand.u32 2147483647, %v346
        %v1502 = vand.u32 %v1501, 8388607
        %v1503 = vor.u32 %v1502, 8388608
        %v1504 = vsub.s32 0, %v1503
        %v1505 = vadd.s32 %v1500, 1
        %vm1506 = vcmp.gt.s32.totalorder %v1505, 0
        %v1507 = vsel %vm1506, %v1505, 0
        %v1508 = vshrl.u32 %v1507, 5
        %v1509 = vand.u32 %v1507, 31
        %v1510 = vsub.s32 32, %v1509
        %v1511 = vshrl.u32 683565275, %v1510
        %v1512 = vshll.u32 683565275, %v1509
        %v1513 = vshrl.u32 2475754826, %v1510
        %v1514 = vor.u32 %v1512, %v1513
        %v1515 = vshll.u32 2475754826, %v1509
        %v1516 = vshrl.u32 2131351028, %v1510
        %v1517 = vor.u32 %v1515, %v1516
        %v1518 = vshll.u32 2131351028, %v1509
        %v1519 = vshrl.u32 2102212464, %v1510
        %v1520 = vor.u32 %v1518, %v1519
        %v1521 = vshll.u32 2102212464, %v1509
        %v1522 = vshrl.u32 920167782, %v1510
        %v1523 = vor.u32 %v1521, %v1522
        %v1524 = vshll.u32 920167782, %v1509
        %v1525 = vshrl.u32 1326507024, %v1510
        %v1526 = vor.u32 %v1524, %v1525
        %vm1527 = vcmp.lt.s32.totalorder %v1508, 1
        %vm1528 = vcmp.lt.s32.totalorder %v1508, 2
        %vm1529 = vcmp.lt.s32.totalorder %v1508, 3
        %vm1530 = vcmp.lt.s32.totalorder %v1508, 4
        %v1531 = vsel %vm1527, %v1511, %v1514
        %v1532 = vsel %vm1530, %v1520, 2102212464
        %v1533 = vsel %vm1529, %v1517, %v1532
        %v1534 = vsel %vm1528, %v1531, %v1533
        %v1535 = vsel %vm1527, %v1514, %v1517
        %v1536 = vsel %vm1530, %v1523, 920167782
        %v1537 = vsel %vm1529, %v1520, %v1536
        %v1538 = vsel %vm1528, %v1535, %v1537
        %v1539 = vsel %vm1527, %v1517, %v1520
        %v1540 = vsel %vm1530, %v1526, 1326507024
        %v1541 = vsel %vm1529, %v1523, %v1540
        %v1542 = vsel %vm1528, %v1539, %v1541
        %v1543 = vshll.u32 %v1503, 8
        %v1544 = vmul.u32.u64.compose %v1543, %v1542
        %v1545 = vextract.low.u32 %v1544
        %v1546 = vextract.high.u32 %v1544
        %v1547 = vmul.u32.u64.compose %v1543, %v1538
        %v1548 = vextract.low.u32 %v1547
        %v1549 = vextract.high.u32 %v1547
        %v1550 = vmul.u32 %v1543, %v1534
        %v1551 = vadd.s32 %v1546, %v1548
        %vm1552 = vc.u32 %v1546, %v1548
        %v1553 = vadd.s32 %v1549, 1
        %v1554 = vsel %vm1552, %v1553, %v1549
        %v1555 = vadd.s32 %v1550, %v1554
        %v1556 = vadd.s32 %v1555, 536870912
        %v1557 = vshrl.u32 %v1556, 30
        %v1558 = vshll.u32 %v1557, 30
        %v1559 = vsub.s32 %v1555, %v1558
        %vm1560 = vcmp.lt.s32.totalorder %v1559, 0
        %v1561 = vsub.s32 0, %v1559
        %v1562 = vsel %vm1560, %v1561, %v1559
        %v1563 = vclz %v1562
        %v1564 = vsub.s32 %v1563, 2
        %vm1565 = vcmp.gt.s32.totalorder 0, %v1564
        %v1566 = vsel %vm1565, 0, %v1564
        %v1567 = vsub.s32 32, %v1566
        %v1568 = vshll.u32 %v1559, %v1566
        %v1569 = vshrl.u32 %v1551, %v1567
        %v1570 = vor.u32 %v1568, %v1569
        %v1571 = vsub.s32 4294967266, %v1566
        %v1572 = vadd.s32 %v1571, 127
        %v1573 = vshll.u32 %v1572, 23
        %v1574 = vor.u32 4788187, %v1573
        %v1575 = vand.u32 2147483647, %v1574
        %v1577 = vcvt.s32.f32 %v1570
        %v1578 = vmul.f32 %v1577, %v1575
        %v1579 = vxor.u32 %v1578, 2147483648
        %v1580 = vsel %vm1497, %v1579, %v1578
        %v1581 = vsub.s32 4, %v1557
        %v1582 = vsel %vm1497, %v1581, %v1557
        %v1583 = vsel %vm1496, %v346, %v1580
        %v1584 = vsel %vm1496, 0, %v1582
        %v1585 = vcosq.f32.pop %v1583
        %v1586 = vsinq.f32.pop %v1583
        %vm1587 = vweird.f32 %v346
        %v1588 = vadd.s32 %v1584, 3
        %v1589 = vand.u32 %v1588, 3
        %vm1590 = vcmp.lt.s32.totalorder %v1589, 2
        %vm1591 = vcmp.eq.s32.totalorder %v1589, 0
        %v1592 = vxor.u32 %v1586, 2147483648
        %v1593 = vsel %vm1591, %v1585, %v1592
        %vm1594 = vcmp.eq.s32.totalorder %v1589, 2
        %v1595 = vxor.u32 %v1585, 2147483648
        %v1596 = vsel %vm1594, %v1595, %v1586
        %v1597 = vsel %vm1590, %v1593, %v1596
        %v1598 = vsel %vm1587, nan, %v1597
        %v1599 = vand.u32 2147483647, %v347
        %vm1600 = vcmp.le.f32.partialorder %v1599, 0.7853982
        %vm1601 = vcmp.lt.s32.totalorder %v347, 0
        %v1602 = vand.u32 %v347, 2139095040
        %v1603 = vshrl.u32 %v1602, 23
        %v1604 = vsub.s32 %v1603, 127
        %v1605 = vand.u32 2147483647, %v347
        %v1606 = vand.u32 %v1605, 8388607
        %v1607 = vor.u32 %v1606, 8388608
        %v1608 = vsub.s32 0, %v1607
        %v1609 = vadd.s32 %v1604, 1
        %vm1610 = vcmp.gt.s32.totalorder %v1609, 0
        %v1611 = vsel %vm1610, %v1609, 0
        %v1612 = vshrl.u32 %v1611, 5
        %v1613 = vand.u32 %v1611, 31
        %v1614 = vsub.s32 32, %v1613
        %v1615 = vshrl.u32 683565275, %v1614
        %v1616 = vshll.u32 683565275, %v1613
        %v1617 = vshrl.u32 2475754826, %v1614
        %v1618 = vor.u32 %v1616, %v1617
        %v1619 = vshll.u32 2475754826, %v1613
        %v1620 = vshrl.u32 2131351028, %v1614
        %v1621 = vor.u32 %v1619, %v1620
        %v1622 = vshll.u32 2131351028, %v1613
        %v1623 = vshrl.u32 2102212464, %v1614
        %v1624 = vor.u32 %v1622, %v1623
        %v1625 = vshll.u32 2102212464, %v1613
        %v1626 = vshrl.u32 920167782, %v1614
        %v1627 = vor.u32 %v1625, %v1626
        %v1628 = vshll.u32 920167782, %v1613
        %v1629 = vshrl.u32 1326507024, %v1614
        %v1630 = vor.u32 %v1628, %v1629
        %vm1631 = vcmp.lt.s32.totalorder %v1612, 1
        %vm1632 = vcmp.lt.s32.totalorder %v1612, 2
        %vm1633 = vcmp.lt.s32.totalorder %v1612, 3
        %vm1634 = vcmp.lt.s32.totalorder %v1612, 4
        %v1635 = vsel %vm1631, %v1615, %v1618
        %v1636 = vsel %vm1634, %v1624, 2102212464
        %v1637 = vsel %vm1633, %v1621, %v1636
        %v1638 = vsel %vm1632, %v1635, %v1637
        %v1639 = vsel %vm1631, %v1618, %v1621
        %v1640 = vsel %vm1634, %v1627, 920167782
        %v1641 = vsel %vm1633, %v1624, %v1640
        %v1642 = vsel %vm1632, %v1639, %v1641
        %v1643 = vsel %vm1631, %v1621, %v1624
        %v1644 = vsel %vm1634, %v1630, 1326507024
        %v1645 = vsel %vm1633, %v1627, %v1644
        %v1646 = vsel %vm1632, %v1643, %v1645
        %v1647 = vshll.u32 %v1607, 8
        %v1648 = vmul.u32.u64.compose %v1647, %v1646
        %v1649 = vextract.low.u32 %v1648
        %v1650 = vextract.high.u32 %v1648
        %v1651 = vmul.u32.u64.compose %v1647, %v1642
        %v1652 = vextract.low.u32 %v1651
        %v1653 = vextract.high.u32 %v1651
        %v1654 = vmul.u32 %v1647, %v1638
        %v1655 = vadd.s32 %v1650, %v1652
        %vm1656 = vc.u32 %v1650, %v1652
        %v1657 = vadd.s32 %v1653, 1
        %v1658 = vsel %vm1656, %v1657, %v1653
        %v1659 = vadd.s32 %v1654, %v1658
        %v1660 = vadd.s32 %v1659, 536870912
        %v1661 = vshrl.u32 %v1660, 30
        %v1662 = vshll.u32 %v1661, 30
        %v1663 = vsub.s32 %v1659, %v1662
        %vm1664 = vcmp.lt.s32.totalorder %v1663, 0
        %v1665 = vsub.s32 0, %v1663
        %v1666 = vsel %vm1664, %v1665, %v1663
        %v1667 = vclz %v1666
        %v1668 = vsub.s32 %v1667, 2
        %vm1669 = vcmp.gt.s32.totalorder 0, %v1668
        %v1670 = vsel %vm1669, 0, %v1668
        %v1671 = vsub.s32 32, %v1670
        %v1672 = vshll.u32 %v1663, %v1670
        %v1673 = vshrl.u32 %v1655, %v1671
        %v1674 = vor.u32 %v1672, %v1673
        %v1675 = vsub.s32 4294967266, %v1670
        %v1676 = vadd.s32 %v1675, 127
        %v1677 = vshll.u32 %v1676, 23
        %v1678 = vor.u32 4788187, %v1677
        %v1679 = vand.u32 2147483647, %v1678
        %v1681 = vcvt.s32.f32 %v1674
        %v1682 = vmul.f32 %v1681, %v1679
        %v1683 = vxor.u32 %v1682, 2147483648
        %v1684 = vsel %vm1601, %v1683, %v1682
        %v1685 = vsub.s32 4, %v1661
        %v1686 = vsel %vm1601, %v1685, %v1661
        %v1687 = vsel %vm1600, %v347, %v1684
        %v1688 = vsel %vm1600, 0, %v1686
        %v1689 = vcosq.f32.pop %v1687
        %v1690 = vsinq.f32.pop %v1687
        %vm1691 = vweird.f32 %v347
        %v1692 = vadd.s32 %v1688, 3
        %v1693 = vand.u32 %v1692, 3
        %vm1694 = vcmp.lt.s32.totalorder %v1693, 2
        %vm1695 = vcmp.eq.s32.totalorder %v1693, 0
        %v1696 = vxor.u32 %v1690, 2147483648
        %v1697 = vsel %vm1695, %v1689, %v1696
        %vm1698 = vcmp.eq.s32.totalorder %v1693, 2
        %v1699 = vxor.u32 %v1689, 2147483648
        %v1700 = vsel %vm1698, %v1699, %v1690
        %v1701 = vsel %vm1694, %v1697, %v1700
        %v1702 = vsel %vm1691, nan, %v1701
        %v1703 = vand.u32 2147483647, %v348
        %vm1704 = vcmp.le.f32.partialorder %v1703, 0.7853982
        %vm1705 = vcmp.lt.s32.totalorder %v348, 0
        %v1706 = vand.u32 %v348, 2139095040
        %v1707 = vshrl.u32 %v1706, 23
        %v1708 = vsub.s32 %v1707, 127
        %v1709 = vand.u32 2147483647, %v348
        %v1710 = vand.u32 %v1709, 8388607
        %v1711 = vor.u32 %v1710, 8388608
        %v1712 = vsub.s32 0, %v1711
        %v1713 = vadd.s32 %v1708, 1
        %vm1714 = vcmp.gt.s32.totalorder %v1713, 0
        %v1715 = vsel %vm1714, %v1713, 0
        %v1716 = vshrl.u32 %v1715, 5
        %v1717 = vand.u32 %v1715, 31
        %v1718 = vsub.s32 32, %v1717
        %v1719 = vshrl.u32 683565275, %v1718
        %v1720 = vshll.u32 683565275, %v1717
        %v1721 = vshrl.u32 2475754826, %v1718
        %v1722 = vor.u32 %v1720, %v1721
        %v1723 = vshll.u32 2475754826, %v1717
        %v1724 = vshrl.u32 2131351028, %v1718
        %v1725 = vor.u32 %v1723, %v1724
        %v1726 = vshll.u32 2131351028, %v1717
        %v1727 = vshrl.u32 2102212464, %v1718
        %v1728 = vor.u32 %v1726, %v1727
        %v1729 = vshll.u32 2102212464, %v1717
        %v1730 = vshrl.u32 920167782, %v1718
        %v1731 = vor.u32 %v1729, %v1730
        %v1732 = vshll.u32 920167782, %v1717
        %v1733 = vshrl.u32 1326507024, %v1718
        %v1734 = vor.u32 %v1732, %v1733
        %vm1735 = vcmp.lt.s32.totalorder %v1716, 1
        %vm1736 = vcmp.lt.s32.totalorder %v1716, 2
        %vm1737 = vcmp.lt.s32.totalorder %v1716, 3
        %vm1738 = vcmp.lt.s32.totalorder %v1716, 4
        %v1739 = vsel %vm1735, %v1719, %v1722
        %v1740 = vsel %vm1738, %v1728, 2102212464
        %v1741 = vsel %vm1737, %v1725, %v1740
        %v1742 = vsel %vm1736, %v1739, %v1741
        %v1743 = vsel %vm1735, %v1722, %v1725
        %v1744 = vsel %vm1738, %v1731, 920167782
        %v1745 = vsel %vm1737, %v1728, %v1744
        %v1746 = vsel %vm1736, %v1743, %v1745
        %v1747 = vsel %vm1735, %v1725, %v1728
        %v1748 = vsel %vm1738, %v1734, 1326507024
        %v1749 = vsel %vm1737, %v1731, %v1748
        %v1750 = vsel %vm1736, %v1747, %v1749
        %v1751 = vshll.u32 %v1711, 8
        %v1752 = vmul.u32.u64.compose %v1751, %v1750
        %v1753 = vextract.low.u32 %v1752
        %v1754 = vextract.high.u32 %v1752
        %v1755 = vmul.u32.u64.compose %v1751, %v1746
        %v1756 = vextract.low.u32 %v1755
        %v1757 = vextract.high.u32 %v1755
        %v1758 = vmul.u32 %v1751, %v1742
        %v1759 = vadd.s32 %v1754, %v1756
        %vm1760 = vc.u32 %v1754, %v1756
        %v1761 = vadd.s32 %v1757, 1
        %v1762 = vsel %vm1760, %v1761, %v1757
        %v1763 = vadd.s32 %v1758, %v1762
        %v1764 = vadd.s32 %v1763, 536870912
        %v1765 = vshrl.u32 %v1764, 30
        %v1766 = vshll.u32 %v1765, 30
        %v1767 = vsub.s32 %v1763, %v1766
        %vm1768 = vcmp.lt.s32.totalorder %v1767, 0
        %v1769 = vsub.s32 0, %v1767
        %v1770 = vsel %vm1768, %v1769, %v1767
        %v1771 = vclz %v1770
        %v1772 = vsub.s32 %v1771, 2
        %vm1773 = vcmp.gt.s32.totalorder 0, %v1772
        %v1774 = vsel %vm1773, 0, %v1772
        %v1775 = vsub.s32 32, %v1774
        %v1776 = vshll.u32 %v1767, %v1774
        %v1777 = vshrl.u32 %v1759, %v1775
        %v1778 = vor.u32 %v1776, %v1777
        %v1779 = vsub.s32 4294967266, %v1774
        %v1780 = vadd.s32 %v1779, 127
        %v1781 = vshll.u32 %v1780, 23
        %v1782 = vor.u32 4788187, %v1781
        %v1783 = vand.u32 2147483647, %v1782
        %v1785 = vcvt.s32.f32 %v1778
        %v1786 = vmul.f32 %v1785, %v1783
        %v1787 = vxor.u32 %v1786, 2147483648
        %v1788 = vsel %vm1705, %v1787, %v1786
        %v1789 = vsub.s32 4, %v1765
        %v1790 = vsel %vm1705, %v1789, %v1765
        %v1791 = vsel %vm1704, %v348, %v1788
        %v1792 = vsel %vm1704, 0, %v1790
        %v1793 = vcosq.f32.pop %v1791
        %v1794 = vsinq.f32.pop %v1791
        %vm1795 = vweird.f32 %v348
        %v1796 = vadd.s32 %v1792, 3
        %v1797 = vand.u32 %v1796, 3
        %vm1798 = vcmp.lt.s32.totalorder %v1797, 2
        %vm1799 = vcmp.eq.s32.totalorder %v1797, 0
        %v1800 = vxor.u32 %v1794, 2147483648
        %v1801 = vsel %vm1799, %v1793, %v1800
        %vm1802 = vcmp.eq.s32.totalorder %v1797, 2
        %v1803 = vxor.u32 %v1793, 2147483648
        %v1804 = vsel %vm1802, %v1803, %v1794
        %v1805 = vsel %vm1798, %v1801, %v1804
        %v1806 = vsel %vm1795, nan, %v1805
        %v1807 = vand.u32 2147483647, %v349
        %vm1808 = vcmp.le.f32.partialorder %v1807, 0.7853982
        %vm1809 = vcmp.lt.s32.totalorder %v349, 0
        %v1810 = vand.u32 %v349, 2139095040
        %v1811 = vshrl.u32 %v1810, 23
        %v1812 = vsub.s32 %v1811, 127
        %v1813 = vand.u32 2147483647, %v349
        %v1814 = vand.u32 %v1813, 8388607
        %v1815 = vor.u32 %v1814, 8388608
        %v1816 = vsub.s32 0, %v1815
        %v1817 = vadd.s32 %v1812, 1
        %vm1818 = vcmp.gt.s32.totalorder %v1817, 0
        %v1819 = vsel %vm1818, %v1817, 0
        %v1820 = vshrl.u32 %v1819, 5
        %v1821 = vand.u32 %v1819, 31
        %v1822 = vsub.s32 32, %v1821
        %v1823 = vshrl.u32 683565275, %v1822
        %v1824 = vshll.u32 683565275, %v1821
        %v1825 = vshrl.u32 2475754826, %v1822
        %v1826 = vor.u32 %v1824, %v1825
        %v1827 = vshll.u32 2475754826, %v1821
        %v1828 = vshrl.u32 2131351028, %v1822
        %v1829 = vor.u32 %v1827, %v1828
        %v1830 = vshll.u32 2131351028, %v1821
        %v1831 = vshrl.u32 2102212464, %v1822
        %v1832 = vor.u32 %v1830, %v1831
        %v1833 = vshll.u32 2102212464, %v1821
        %v1834 = vshrl.u32 920167782, %v1822
        %v1835 = vor.u32 %v1833, %v1834
        %v1836 = vshll.u32 920167782, %v1821
        %v1837 = vshrl.u32 1326507024, %v1822
        %v1838 = vor.u32 %v1836, %v1837
        %vm1839 = vcmp.lt.s32.totalorder %v1820, 1
        %vm1840 = vcmp.lt.s32.totalorder %v1820, 2
        %vm1841 = vcmp.lt.s32.totalorder %v1820, 3
        %vm1842 = vcmp.lt.s32.totalorder %v1820, 4
        %v1843 = vsel %vm1839, %v1823, %v1826
        %v1844 = vsel %vm1842, %v1832, 2102212464
        %v1845 = vsel %vm1841, %v1829, %v1844
        %v1846 = vsel %vm1840, %v1843, %v1845
        %v1847 = vsel %vm1839, %v1826, %v1829
        %v1848 = vsel %vm1842, %v1835, 920167782
        %v1849 = vsel %vm1841, %v1832, %v1848
        %v1850 = vsel %vm1840, %v1847, %v1849
        %v1851 = vsel %vm1839, %v1829, %v1832
        %v1852 = vsel %vm1842, %v1838, 1326507024
        %v1853 = vsel %vm1841, %v1835, %v1852
        %v1854 = vsel %vm1840, %v1851, %v1853
        %v1855 = vshll.u32 %v1815, 8
        %v1856 = vmul.u32.u64.compose %v1855, %v1854
        %v1857 = vextract.low.u32 %v1856
        %v1858 = vextract.high.u32 %v1856
        %v1859 = vmul.u32.u64.compose %v1855, %v1850
        %v1860 = vextract.low.u32 %v1859
        %v1861 = vextract.high.u32 %v1859
        %v1862 = vmul.u32 %v1855, %v1846
        %v1863 = vadd.s32 %v1858, %v1860
        %vm1864 = vc.u32 %v1858, %v1860
        %v1865 = vadd.s32 %v1861, 1
        %v1866 = vsel %vm1864, %v1865, %v1861
        %v1867 = vadd.s32 %v1862, %v1866
        %v1868 = vadd.s32 %v1867, 536870912
        %v1869 = vshrl.u32 %v1868, 30
        %v1870 = vshll.u32 %v1869, 30
        %v1871 = vsub.s32 %v1867, %v1870
        %vm1872 = vcmp.lt.s32.totalorder %v1871, 0
        %v1873 = vsub.s32 0, %v1871
        %v1874 = vsel %vm1872, %v1873, %v1871
        %v1875 = vclz %v1874
        %v1876 = vsub.s32 %v1875, 2
        %vm1877 = vcmp.gt.s32.totalorder 0, %v1876
        %v1878 = vsel %vm1877, 0, %v1876
        %v1879 = vsub.s32 32, %v1878
        %v1880 = vshll.u32 %v1871, %v1878
        %v1881 = vshrl.u32 %v1863, %v1879
        %v1882 = vor.u32 %v1880, %v1881
        %v1883 = vsub.s32 4294967266, %v1878
        %v1884 = vadd.s32 %v1883, 127
        %v1885 = vshll.u32 %v1884, 23
        %v1886 = vor.u32 4788187, %v1885
        %v1887 = vand.u32 2147483647, %v1886
        %v1889 = vcvt.s32.f32 %v1882
        %v1890 = vmul.f32 %v1889, %v1887
        %v1891 = vxor.u32 %v1890, 2147483648
        %v1892 = vsel %vm1809, %v1891, %v1890
        %v1893 = vsub.s32 4, %v1869
        %v1894 = vsel %vm1809, %v1893, %v1869
        %v1895 = vsel %vm1808, %v349, %v1892
        %v1896 = vsel %vm1808, 0, %v1894
        %v1897 = vcosq.f32.pop %v1895
        %v1898 = vsinq.f32.pop %v1895
        %vm1899 = vweird.f32 %v349
        %v1900 = vadd.s32 %v1896, 3
        %v1901 = vand.u32 %v1900, 3
        %vm1902 = vcmp.lt.s32.totalorder %v1901, 2
        %vm1903 = vcmp.eq.s32.totalorder %v1901, 0
        %v1904 = vxor.u32 %v1898, 2147483648
        %v1905 = vsel %vm1903, %v1897, %v1904
        %vm1906 = vcmp.eq.s32.totalorder %v1901, 2
        %v1907 = vxor.u32 %v1897, 2147483648
        %v1908 = vsel %vm1906, %v1907, %v1898
        %v1909 = vsel %vm1902, %v1905, %v1908
        %v1910 = vsel %vm1899, nan, %v1909
        %v1911 = vand.u32 2147483647, %v350
        %vm1912 = vcmp.le.f32.partialorder %v1911, 0.7853982
        %vm1913 = vcmp.lt.s32.totalorder %v350, 0
        %v1914 = vand.u32 %v350, 2139095040
        %v1915 = vshrl.u32 %v1914, 23
        %v1916 = vsub.s32 %v1915, 127
        %v1917 = vand.u32 2147483647, %v350
        %v1918 = vand.u32 %v1917, 8388607
        %v1919 = vor.u32 %v1918, 8388608
        %v1920 = vsub.s32 0, %v1919
        %v1921 = vadd.s32 %v1916, 1
        %vm1922 = vcmp.gt.s32.totalorder %v1921, 0
        %v1923 = vsel %vm1922, %v1921, 0
        %v1924 = vshrl.u32 %v1923, 5
        %v1925 = vand.u32 %v1923, 31
        %v1926 = vsub.s32 32, %v1925
        %v1927 = vshrl.u32 683565275, %v1926
        %v1928 = vshll.u32 683565275, %v1925
        %v1929 = vshrl.u32 2475754826, %v1926
        %v1930 = vor.u32 %v1928, %v1929
        %v1931 = vshll.u32 2475754826, %v1925
        %v1932 = vshrl.u32 2131351028, %v1926
        %v1933 = vor.u32 %v1931, %v1932
        %v1934 = vshll.u32 2131351028, %v1925
        %v1935 = vshrl.u32 2102212464, %v1926
        %v1936 = vor.u32 %v1934, %v1935
        %v1937 = vshll.u32 2102212464, %v1925
        %v1938 = vshrl.u32 920167782, %v1926
        %v1939 = vor.u32 %v1937, %v1938
        %v1940 = vshll.u32 920167782, %v1925
        %v1941 = vshrl.u32 1326507024, %v1926
        %v1942 = vor.u32 %v1940, %v1941
        %vm1943 = vcmp.lt.s32.totalorder %v1924, 1
        %vm1944 = vcmp.lt.s32.totalorder %v1924, 2
        %vm1945 = vcmp.lt.s32.totalorder %v1924, 3
        %vm1946 = vcmp.lt.s32.totalorder %v1924, 4
        %v1947 = vsel %vm1943, %v1927, %v1930
        %v1948 = vsel %vm1946, %v1936, 2102212464
        %v1949 = vsel %vm1945, %v1933, %v1948
        %v1950 = vsel %vm1944, %v1947, %v1949
        %v1951 = vsel %vm1943, %v1930, %v1933
        %v1952 = vsel %vm1946, %v1939, 920167782
        %v1953 = vsel %vm1945, %v1936, %v1952
        %v1954 = vsel %vm1944, %v1951, %v1953
        %v1955 = vsel %vm1943, %v1933, %v1936
        %v1956 = vsel %vm1946, %v1942, 1326507024
        %v1957 = vsel %vm1945, %v1939, %v1956
        %v1958 = vsel %vm1944, %v1955, %v1957
        %v1959 = vshll.u32 %v1919, 8
        %v1960 = vmul.u32.u64.compose %v1959, %v1958
        %v1961 = vextract.low.u32 %v1960
        %v1962 = vextract.high.u32 %v1960
        %v1963 = vmul.u32.u64.compose %v1959, %v1954
        %v1964 = vextract.low.u32 %v1963
        %v1965 = vextract.high.u32 %v1963
        %v1966 = vmul.u32 %v1959, %v1950
        %v1967 = vadd.s32 %v1962, %v1964
        %vm1968 = vc.u32 %v1962, %v1964
        %v1969 = vadd.s32 %v1965, 1
        %v1970 = vsel %vm1968, %v1969, %v1965
        %v1971 = vadd.s32 %v1966, %v1970
        %v1972 = vadd.s32 %v1971, 536870912
        %v1973 = vshrl.u32 %v1972, 30
        %v1974 = vshll.u32 %v1973, 30
        %v1975 = vsub.s32 %v1971, %v1974
        %vm1976 = vcmp.lt.s32.totalorder %v1975, 0
        %v1977 = vsub.s32 0, %v1975
        %v1978 = vsel %vm1976, %v1977, %v1975
        %v1979 = vclz %v1978
        %v1980 = vsub.s32 %v1979, 2
        %vm1981 = vcmp.gt.s32.totalorder 0, %v1980
        %v1982 = vsel %vm1981, 0, %v1980
        %v1983 = vsub.s32 32, %v1982
        %v1984 = vshll.u32 %v1975, %v1982
        %v1985 = vshrl.u32 %v1967, %v1983
        %v1986 = vor.u32 %v1984, %v1985
        %v1987 = vsub.s32 4294967266, %v1982
        %v1988 = vadd.s32 %v1987, 127
        %v1989 = vshll.u32 %v1988, 23
        %v1990 = vor.u32 4788187, %v1989
        %v1991 = vand.u32 2147483647, %v1990
        %v1993 = vcvt.s32.f32 %v1986
        %v1994 = vmul.f32 %v1993, %v1991
        %v1995 = vxor.u32 %v1994, 2147483648
        %v1996 = vsel %vm1913, %v1995, %v1994
        %v1997 = vsub.s32 4, %v1973
        %v1998 = vsel %vm1913, %v1997, %v1973
        %v1999 = vsel %vm1912, %v350, %v1996
        %v2000 = vsel %vm1912, 0, %v1998
        %v2001 = vcosq.f32.pop %v1999
        %v2002 = vsinq.f32.pop %v1999
        %vm2003 = vweird.f32 %v350
        %v2004 = vadd.s32 %v2000, 3
        %v2005 = vand.u32 %v2004, 3
        %vm2006 = vcmp.lt.s32.totalorder %v2005, 2
        %vm2007 = vcmp.eq.s32.totalorder %v2005, 0
        %v2008 = vxor.u32 %v2002, 2147483648
        %v2009 = vsel %vm2007, %v2001, %v2008
        %vm2010 = vcmp.eq.s32.totalorder %v2005, 2
        %v2011 = vxor.u32 %v2001, 2147483648
        %v2012 = vsel %vm2010, %v2011, %v2002
        %v2013 = vsel %vm2006, %v2009, %v2012
        %v2014 = vsel %vm2003, nan, %v2013
        %v2015 = vlaneseq
        %v2016 = vshrl.u32 %v2015, 7
        %v2017 = vadd.s32 %v2016, 8
        %v2018 = vadd.s32 %v2016, 16
        %v2019 = vadd.s32 %v2016, 24
        %v2020 = vadd.s32 %v2016, 32
        %v2021 = vadd.s32 %v2016, 40
        %v2022 = vadd.s32 %v2016, 48
        %v2023 = vadd.s32 %v2016, 56
        %vm2024 = vcmp.lt.s32.totalorder %v2016, 3
        %vm2025 = vcmp.lt.s32.totalorder %v2017, 3
        %vm2026 = vcmp.lt.s32.totalorder %v2018, 3
        %vm2027 = vcmp.lt.s32.totalorder %v2019, 3
        %vm2028 = vcmp.lt.s32.totalorder %v2020, 3
        %vm2029 = vcmp.lt.s32.totalorder %v2021, 3
        %vm2030 = vcmp.lt.s32.totalorder %v2022, 3
        %vm2031 = vcmp.lt.s32.totalorder %v2023, 3
        %v2032 = vsel %vm2024, %v335, %v454
        %v2033 = vsel %vm2024, %v336, %v558
        %v2034 = vsel %vm2025, %v337, %v662
        %v2035 = vsel %vm2025, %v338, %v766
        %v2036 = vsel %vm2026, %v339, %v870
        %v2037 = vsel %vm2026, %v340, %v974
        %v2038 = vsel %vm2027, %v341, %v1078
        %v2039 = vsel %vm2027, %v342, %v1182
        %v2040 = vsel %vm2028, %v343, %v1286
        %v2041 = vsel %vm2028, %v344, %v1390
        %v2042 = vsel %vm2029, %v345, %v1494
        %v2043 = vsel %vm2029, %v346, %v1598
        %v2044 = vsel %vm2030, %v347, %v1702
        %v2045 = vsel %vm2030, %v348, %v1806
        %v2046 = vsel %vm2031, %v349, %v1910
        %v2047 = vsel %vm2031, %v350, %v2014
        %2048 = vst [vmem:[%s164] sm:$0xff] %v2032
        %2049 = vst [vmem:[%s164 + $0x8] sm:$0xff] %v2033
        %2050 = vst [vmem:[%s164 + $0x10] sm:$0xff] %v2034
        %2051 = vst [vmem:[%s164 + $0x18] sm:$0xff] %v2035
        %2052 = vst [vmem:[%s164 + $0x20] sm:$0xff] %v2036
        %2053 = vst [vmem:[%s164 + $0x28] sm:$0xff] %v2037
        %2054 = vst [vmem:[%s164 + $0x30] sm:$0xff] %v2038
        %2055 = vst [vmem:[%s164 + $0x38] sm:$0xff] %v2039
        %2056 = vst [vmem:[%s164 + $0x40] sm:$0xff] %v2040
        %2057 = vst [vmem:[%s164 + $0x48] sm:$0xff] %v2041
        %2058 = vst [vmem:[%s164 + $0x50] sm:$0xff] %v2042
        %2059 = vst [vmem:[%s164 + $0x58] sm:$0xff] %v2043
        %2060 = vst [vmem:[%s164 + $0x60] sm:$0xff] %v2044
        %2061 = vst [vmem:[%s164 + $0x68] sm:$0xff] %v2045
        %2062 = vst [vmem:[%s164 + $0x70] sm:$0x7f] %v2046
        %2063 = vst [vmem:[%s164 + $0x78] sm:$0x7f] %v2047
        %s2064 = sand.u32 %s93, 1
        %s2065 = scalar_lea.sflag [#allocation3], %s2064
        %s2066 = sand.u32 %s93, 1
        %s2067 = smul.addr %s2066, 128
        %s2068 = scalar_lea.vmem [#allocation2], %s2067
        // Predicated region
        $region33: #{tpu_custom_call.1} parent=31 // pred_check
          %p2069 = pneg %p103
        $region34: #{tpu_custom_call.1} parent=31 // pred_check_branch
          %2071 = sbr.rel (%p2069) target = $region36
        $region35: #{tpu_custom_call.1} parent=31 // pred_region
          %s2072 = smul.u32 2, %s17
          %s2074 = ssub.s32 2048, 2048
          %2075 = vsyncadd %s2065, %s2074
          %s2076 = smul.addr %s2072, 128
          %s2077 = scalar_lea.hbm %s3, %s2076
          %s2078 = sshll.u32 %s2068, 4
          %s2079 = int_to_ptr.vmem [resolvable:$true] %s2078
          %2084 = dma.vmem_to_hbm [thread:$0]  %s2079, 2048, %s2077, %s2065, 256, 1024, 16
        $region36: #{tpu_custom_call.1} parent=31 // pred_fallthru
          _
      $region32: #{tpu_custom_call.1} parent=5 // pred_fallthru
        _
      %p2085 = scmp.le.s32.totalorder 2, %s12
      // Predicated region
      $region37: #{tpu_custom_call.1} parent=5 // pred_check
        %p2086 = pneg %p2085
      $region38: #{tpu_custom_call.1} parent=5 // pred_check_branch
        %2088 = sbr.rel (%p2086) target = $region40
      $region39: #{tpu_custom_call.1} parent=5 // pred_region
        %s2089 = ssub.s32 %s12, 2
        // Predicated region
        $region41: #{tpu_custom_call.1} parent=39 // pred_check
          %p2090 = pneg %p109
        $region42: #{tpu_custom_call.1} parent=39 // pred_check_branch
          %2092 = sbr.rel (%p2090) target = $region44
        $region43: #{tpu_custom_call.1} parent=39 // pred_region
          %s2093 = sand.u32 %s94, 1
          %s2094 = scalar_lea.sflag [#allocation3], %s2093
          %s2095 = sand.u32 %s94, 1
          %s2096 = smul.addr %s2095, 128
          %s2097 = scalar_lea.vmem [#allocation2], %s2096
          %2098 = dma.done %s2094, 2048
        $region44: #{tpu_custom_call.1} parent=39 // pred_fallthru
          _
      $region40: #{tpu_custom_call.1} parent=5 // pred_fallthru
        _
    $region6: #{tpu_custom_call.1} parent=1 // loop_footer
      %s16 = sadd.s32 1, %s12
    $region7: #{tpu_custom_call.1} parent=1 // loop_footer_branch
      %11 = sbr.rel target = $region3
    $region8: #{tpu_custom_call.1} parent=1 // loop_exit
      _
    %2099 = vsyncpa [#allocation3], 1
    %s2100 = scalar_lea.sflag [#allocation3], 1
    %2101 = vsyncpa %s2100, 1

</llo_original>
